<compile_context>
chip_gen: v7x
topology: tpu7x:2x2x1
jax: 0.10.0
libtpu: 0.0.40
codegen_flags: <defaults>
</compile_context>

<pallas_src>
import jax
import jax.numpy as jnp
from jax.experimental import pallas as pl
from jax.experimental.pallas import tpu as pltpu


def _pick_row_tile(h, w, target_rows=1024):
    """Largest divisor of h whose tile (rows*w) stays near the target size."""
    best = 1
    for th in range(1, h + 1):
        if h % th == 0 and th * w <= target_rows:
            best = th
    return best


def _make_kernel(row_tile, w, c_in, c_hid, c_out):
    th = row_tile
    wp = w + 2                      # width incl. left/right zero-pad columns
    r_in = (th + 2) * wp            # rows per input tile (incl. halo rows)
    r_out = th * wp                 # rows per output tile (pad cols sliced off later)
    off = 8                         # sublane-aligned write offset of y1 in scratch
    s_rows = r_in + 2 * off         # scratch rows (guard rows on both sides)

    def kernel(x_ref, m_ref, w1_ref, b1_ref, w2_ref, b2_ref, w3_ref, b3_ref,
               out_ref, pad_ref):
        x = x_ref[...]                                        # [r_in, c_in] bf16
        mask = m_ref[...]                                     # [r_in, 1]   f32

        # ---- layer1: 1x1 conv + folded BN + ReLU ------------------------
        # mask zeroes y1 at spatial-padding positions (true 2D zero padding
        # for the following 3x3 conv), including image-boundary halo rows.
        y1 = jnp.dot(x, w1_ref[...], preferred_element_type=jnp.float32)
        y1 = jnp.maximum(y1 + b1_ref[...], 0.0) * mask        # [r_in, c_hid]

        # Guard rows (only read by the two corner taps) + aligned y1 store.
        pad_ref[0:off, :] = jnp.zeros((off, c_hid), jnp.float32)
        pad_ref[s_rows - off:s_rows, :] = jnp.zeros((off, c_hid), jnp.float32)
        pad_ref[off:off + r_in, :] = y1

        # ---- layer2: 3x3 conv (padding=1) as ONE fused K=9*c_hid matmul --
        taps = [pad_ref[off - 1 + ki * wp + kj:
                        off - 1 + ki * wp + kj + r_out, :]
                for ki in range(3) for kj in range(3)]        # 9 x [r_out, c_hid]
        cat = jnp.concatenate(taps, axis=1)                   # [r_out, 9*c_hid]
        y2 = jnp.dot(cat.astype(jnp.bfloat16), w2_ref[...],
                     preferred_element_type=jnp.float32)
        y2 = jnp.maximum(y2 + b2_ref[...], 0.0)               # [r_out, c_hid]

        # ---- layer3: 1x1 conv + folded BN (no ReLU) ----------------------
        y3 = jnp.dot(y2.astype(jnp.bfloat16), w3_ref[...],
                     preferred_element_type=jnp.float32)
        y3 = y3 + b3_ref[...]                                 # [r_out, c_out]

        # ---- identity skip + final ReLU ----------------------------------
        x_res = x[wp:wp + r_out, :].astype(jnp.float32)
        out_ref[...] = jnp.maximum(x_res + y3, 0.0)

    return kernel, r_in, r_out, s_rows


def resnet_bottleneck_forward(x_nchw, params, row_tile=None):
    n, c_in, h, w = x_nchw.shape
    c_hid = params["b1"].shape[-1]
    c_out = params["b3"].shape[-1]
    assert c_in == c_out, "identity skip requires in_planes == out_planes"

    if row_tile is None:
        row_tile = _pick_row_tile(h, w)
    assert h % row_tile == 0, "row_tile must divide H"
    th, wp, n_t = row_tile, w + 2, h // row_tile

    kernel, r_in, r_out, s_rows = _make_kernel(th, w, c_in, c_hid, c_out)

    # NCHW -> NHWC, zero-pad spatially, then gather overlapping row windows
    # (+1 halo row top/bottom per tile) so every grid step is independent.
    x_nhwc = jnp.transpose(x_nchw, (0, 2, 3, 1))                    # [N,H,W,C]
    x_pad = jnp.pad(x_nhwc, ((0, 0), (1, 1), (1, 1), (0, 0)))       # [N,H+2,Wp,C]
    ridx = jnp.arange(n_t)[:, None] * th + jnp.arange(th + 2)[None, :]
    x_win = x_pad[:, ridx].reshape(n, n_t, r_in, c_in).astype(jnp.bfloat16)

    # Validity mask (1 inside the image, 0 in the zero padding), same windows.
    m2d = jnp.pad(jnp.ones((h, w), jnp.float32), ((1, 1), (1, 1)))  # [H+2,Wp]
    m_win = m2d[ridx].reshape(n_t, r_in, 1)

    out_flat = pl.pallas_call(
        kernel,
        out_shape=jax.ShapeDtypeStruct((n, n_t, r_out, c_out), jnp.float32),
        grid=(n, n_t),
        in_specs=[
            pl.BlockSpec((None, None, r_in, c_in), lambda b, t: (b, t, 0, 0)),
            pl.BlockSpec((None, r_in, 1), lambda b, t: (t, 0, 0)),
            # weights / biases: constant index maps -> resident in VMEM
            pl.BlockSpec((c_in, c_hid), lambda b, t: (0, 0)),
            pl.BlockSpec((1, c_hid), lambda b, t: (0, 0)),
            pl.BlockSpec((9 * c_hid, c_hid), lambda b, t: (0, 0)),
            pl.BlockSpec((1, c_hid), lambda b, t: (0, 0)),
            pl.BlockSpec((c_hid, c_out), lambda b, t: (0, 0)),
            pl.BlockSpec((1, c_out), lambda b, t: (0, 0)),
        ],
        out_specs=pl.BlockSpec((None, None, r_out, c_out),
                               lambda b, t: (b, t, 0, 0)),
        scratch_shapes=[pltpu.VMEM((s_rows, c_hid), jnp.float32)],
        compiler_params=pltpu.CompilerParams(
            dimension_semantics=("parallel", "parallel"),
            vmem_limit_bytes=32 * 1024 * 1024),
    )(x_win, m_win, params["w1"], params["b1"], params["w2"], params["b2"],
      params["w3"], params["b3"])

    out = out_flat.reshape(n, n_t, th, wp, c_out).reshape(n, h, wp, c_out)
    out = out[:, :, 1:w + 1, :]                                  # drop pad cols
    return jnp.transpose(out, (0, 3, 1, 2))                      # -> NCHW


# ------------------------- parameter setup (glue) ---------------------------

def _fold_bn(conv_w, gamma, beta, mu, var, eps=1e-5):
    scale = gamma / jnp.sqrt(var + eps)
    w = conv_w * scale[:, None, None, None]
    b = beta - mu * scale
    return w, b


def init_params(key, c_in, c_hid, c_out):
    keys = jax.random.split(key, 6)

    def bn_params(k, c):
        k1, k2, k3, k4 = jax.random.split(k, 4)
        gamma = jax.random.uniform(k1, (c,), jnp.float32, 0.5, 1.5)
        beta = 0.1 * jax.random.normal(k2, (c,), jnp.float32)
        mu = 0.1 * jax.random.normal(k3, (c,), jnp.float32)
        var = jax.random.uniform(k4, (c,), jnp.float32, 0.5, 1.5)
        return gamma, beta, mu, var

    cw1 = 0.3 * jax.random.normal(keys[0], (c_hid, c_in, 1, 1), jnp.float32)
    cw2 = 0.3 * jax.random.normal(keys[1], (c_hid, c_hid, 3, 3), jnp.float32)
    cw3 = 0.3 * jax.random.normal(keys[2], (c_out, c_hid, 1, 1), jnp.float32)

    cw1f, b1 = _fold_bn(cw1, *bn_params(keys[3], c_hid))
    cw2f, b2 = _fold_bn(cw2, *bn_params(keys[4], c_hid))
    cw3f, b3 = _fold_bn(cw3, *bn_params(keys[5], c_out))

    # 3x3 weights stacked along K in (ki, kj) row-major order -> [9*Chid, Chid],
    # matching the kernel's im2col concat order.
    w2_cat = jnp.concatenate([cw2f[:, :, ki, kj].T
                              for ki in range(3) for kj in range(3)], axis=0)

    return {
        # matmul-form (channels-last) folded weights for the kernel (bf16 inputs)
        "w1": cw1f[:, :, 0, 0].T.astype(jnp.bfloat16), "b1": b1[None, :],
        "w2": w2_cat.astype(jnp.bfloat16),             "b2": b2[None, :],
        "w3": cw3f[:, :, 0, 0].T.astype(jnp.bfloat16), "b3": b3[None, :],
        # folded NCHW f32 conv weights for the pure-JAX reference
        "cw1": cw1f, "cw2": cw2f, "cw3": cw3f,
        "cb1": b1, "cb2": b2, "cb3": b3,
    }


def reference_forward(x, p):
    def conv(z, w, b, pad):
        y = jax.lax.conv_general_dilated(
            z, w, window_strides=(1, 1), padding=((pad, pad), (pad, pad)),
            dimension_numbers=("NCHW", "OIHW", "NCHW"))
        return y + b[None, :, None, None]

    y = jax.nn.relu(conv(x, p["cw1"], p["cb1"], 0))
    y = jax.nn.relu(conv(y, p["cw2"], p["cb2"], 1))
    y = conv(y, p["cw3"], p["cb3"], 0)
    return jax.nn.relu(x + y)


if __name__ == "__main__":
    key = jax.random.PRNGKey(0)
    kx, kp = jax.random.split(key)

    N, C, H, W = 2, 4, 16, 16                  # in_planes = hidden = out = 4
    x = jax.random.normal(kx, (N, C, H, W), jnp.float32)
    params = init_params(kp, C, C, C)

    ref = reference_forward(x, params)

    # Tolerance is 3e-2 because the kernel uses bf16 matmul inputs (f32
    # accumulation) while the reference runs entirely in f32.
    for rt in (8, 16):                         # multi-tile (halo path) + single tile
        out = jax.block_until_ready(resnet_bottleneck_forward(x, params, row_tile=rt))
        assert out.shape == ref.shape == (N, C, H, W)
        err = float(jnp.max(jnp.abs(out - ref)))
        assert jnp.allclose(out, ref, rtol=3e-2, atol=3e-2), (rt, err)

    print("KERNEL_OK")
</pallas_src>

<mosaic_0001>
module attributes {stable_mosaic.version = 11 : i64} {
  func.func @kernel(%arg0: i32, %arg1: i32, %arg2: memref<1x1x180x4xbf16, #tpu.memory_space<vmem>>, %arg3: memref<1x180x1xf32, #tpu.memory_space<vmem>>, %arg4: memref<4x4xbf16, #tpu.memory_space<vmem>>, %arg5: memref<1x4xf32, #tpu.memory_space<vmem>>, %arg6: memref<36x4xbf16, #tpu.memory_space<vmem>>, %arg7: memref<1x4xf32, #tpu.memory_space<vmem>>, %arg8: memref<4x4xbf16, #tpu.memory_space<vmem>>, %arg9: memref<1x4xf32, #tpu.memory_space<vmem>>, %arg10: memref<1x1x144x4xf32, #tpu.memory_space<vmem>>, %arg11: memref<196x4xf32, #tpu.memory_space<vmem>>) attributes {dimension_semantics = [#tpu.dimension_semantics<parallel>, #tpu.dimension_semantics<parallel>], iteration_bounds = array<i64: 2, 2>, scalar_prefetch = 0 : i64, scratch_operands = 1 : i64, tpu.core_type = #tpu.core_type<tc>, window_params = [{transform_indices = @transform_0, window_bounds = array<i64: 1, 1, 180, 4>}, {transform_indices = @transform_1, window_bounds = array<i64: 1, 180, 1>}, {pipeline_mode = #tpu.pipeline_mode<synchronous>, transform_indices = @transform_2, window_bounds = array<i64: 4, 4>}, {pipeline_mode = #tpu.pipeline_mode<synchronous>, transform_indices = @transform_3, window_bounds = array<i64: 1, 4>}, {pipeline_mode = #tpu.pipeline_mode<synchronous>, transform_indices = @transform_4, window_bounds = array<i64: 36, 4>}, {pipeline_mode = #tpu.pipeline_mode<synchronous>, transform_indices = @transform_5, window_bounds = array<i64: 1, 4>}, {pipeline_mode = #tpu.pipeline_mode<synchronous>, transform_indices = @transform_6, window_bounds = array<i64: 4, 4>}, {pipeline_mode = #tpu.pipeline_mode<synchronous>, transform_indices = @transform_7, window_bounds = array<i64: 1, 4>}, {transform_indices = @transform_8, window_bounds = array<i64: 1, 1, 144, 4>}]} {
    %c0 = arith.constant 0 : index
    %c0_0 = arith.constant 0 : index
    %c0_1 = arith.constant 0 : index
    %c0_2 = arith.constant 0 : index
    %0 = vector.load %arg2[%c0, %c0_0, %c0_1, %c0_2] : memref<1x1x180x4xbf16, #tpu.memory_space<vmem>>, vector<1x1x180x4xbf16>
    %1 = vector.shape_cast %0 : vector<1x1x180x4xbf16> to vector<180x4xbf16>
    %c0_3 = arith.constant 0 : index
    %c0_4 = arith.constant 0 : index
    %c0_5 = arith.constant 0 : index
    %2 = vector.load %arg3[%c0_3, %c0_4, %c0_5] : memref<1x180x1xf32, #tpu.memory_space<vmem>>, vector<1x180x1xf32>
    %3 = vector.shape_cast %2 : vector<1x180x1xf32> to vector<180x1xf32>
    %c0_6 = arith.constant 0 : index
    %c0_7 = arith.constant 0 : index
    %4 = vector.load %arg4[%c0_6, %c0_7] : memref<4x4xbf16, #tpu.memory_space<vmem>>, vector<4x4xbf16>
    %cst = arith.constant dense<0.000000e+00> : vector<180x4xf32>
    %5 = tpu.matmul %1, %4, %cst {dimension_numbers = #tpu.dot_dimension_numbers<[1], [0], [0], [1], [0, 0, 1, 1], [], []>} : vector<180x4xbf16>, vector<4x4xbf16>, vector<180x4xf32> -> vector<180x4xf32>
    %c0_8 = arith.constant 0 : index
    %c0_9 = arith.constant 0 : index
    %6 = vector.load %arg5[%c0_8, %c0_9] : memref<1x4xf32, #tpu.memory_space<vmem>>, vector<1x4xf32>
    %7 = vector.broadcast %6 : vector<1x4xf32> to vector<180x4xf32>
    %8 = arith.addf %5, %7 : vector<180x4xf32>
    %cst_10 = arith.constant 0.000000e+00 : f32
    %9 = vector.broadcast %cst_10 : f32 to vector<180x4xf32>
    %10 = arith.maximumf %8, %9 : vector<180x4xf32>
    %11 = vector.broadcast %3 : vector<180x1xf32> to vector<180x4xf32>
    %12 = arith.mulf %10, %11 : vector<180x4xf32>
    %cst_11 = arith.constant 0.000000e+00 : f32
    %13 = vector.broadcast %cst_11 : f32 to vector<8x4xf32>
    %c0_12 = arith.constant 0 : index
    %c0_13 = arith.constant 0 : index
    %14 = vector.load %arg11[%c0_12, %c0_13] : memref<196x4xf32, #tpu.memory_space<vmem>>, vector<8x4xf32>
    tpu.vector_store %arg11[%c0_12, %c0_13], %13 {strides = array<i32>} : memref<196x4xf32, #tpu.memory_space<vmem>>, vector<8x4xf32>,
    %cst_14 = arith.constant 0.000000e+00 : f32
    %15 = vector.broadcast %cst_14 : f32 to vector<8x4xf32>
    %c188 = arith.constant 188 : index
    %c0_15 = arith.constant 0 : index
    %16 = vector.load %arg11[%c188, %c0_15] : memref<196x4xf32, #tpu.memory_space<vmem>>, vector<8x4xf32>
    tpu.vector_store %arg11[%c188, %c0_15], %15 {strides = array<i32>} : memref<196x4xf32, #tpu.memory_space<vmem>>, vector<8x4xf32>,
    %c8 = arith.constant 8 : index
    %c0_16 = arith.constant 0 : index
    %17 = vector.load %arg11[%c8, %c0_16] : memref<196x4xf32, #tpu.memory_space<vmem>>, vector<180x4xf32>
    tpu.vector_store %arg11[%c8, %c0_16], %12 {strides = array<i32>} : memref<196x4xf32, #tpu.memory_space<vmem>>, vector<180x4xf32>,
    %c7 = arith.constant 7 : index
    %c0_17 = arith.constant 0 : index
    %18 = vector.load %arg11[%c7, %c0_17] : memref<196x4xf32, #tpu.memory_space<vmem>>, vector<144x4xf32>
    %c8_18 = arith.constant 8 : index
    %c0_19 = arith.constant 0 : index
    %19 = vector.load %arg11[%c8_18, %c0_19] : memref<196x4xf32, #tpu.memory_space<vmem>>, vector<144x4xf32>
    %c9 = arith.constant 9 : index
    %c0_20 = arith.constant 0 : index
    %20 = vector.load %arg11[%c9, %c0_20] : memref<196x4xf32, #tpu.memory_space<vmem>>, vector<144x4xf32>
    %c25 = arith.constant 25 : index
    %c0_21 = arith.constant 0 : index
    %21 = vector.load %arg11[%c25, %c0_21] : memref<196x4xf32, #tpu.memory_space<vmem>>, vector<144x4xf32>
    %c26 = arith.constant 26 : index
    %c0_22 = arith.constant 0 : index
    %22 = vector.load %arg11[%c26, %c0_22] : memref<196x4xf32, #tpu.memory_space<vmem>>, vector<144x4xf32>
    %c27 = arith.constant 27 : index
    %c0_23 = arith.constant 0 : index
    %23 = vector.load %arg11[%c27, %c0_23] : memref<196x4xf32, #tpu.memory_space<vmem>>, vector<144x4xf32>
    %c43 = arith.constant 43 : index
    %c0_24 = arith.constant 0 : index
    %24 = vector.load %arg11[%c43, %c0_24] : memref<196x4xf32, #tpu.memory_space<vmem>>, vector<144x4xf32>
    %c44 = arith.constant 44 : index
    %c0_25 = arith.constant 0 : index
    %25 = vector.load %arg11[%c44, %c0_25] : memref<196x4xf32, #tpu.memory_space<vmem>>, vector<144x4xf32>
    %c45 = arith.constant 45 : index
    %c0_26 = arith.constant 0 : index
    %26 = vector.load %arg11[%c45, %c0_26] : memref<196x4xf32, #tpu.memory_space<vmem>>, vector<144x4xf32>
    %27 = tpu.concatenate %18, %19, %20, %21, %22, %23, %24, %25, %26 in 1 : vector<144x4xf32>, vector<144x4xf32>, vector<144x4xf32>, vector<144x4xf32>, vector<144x4xf32>, vector<144x4xf32>, vector<144x4xf32>, vector<144x4xf32>, vector<144x4xf32> -> vector<144x36xf32>
    %28 = arith.truncf %27 : vector<144x36xf32> to vector<144x36xbf16>
    %c0_27 = arith.constant 0 : index
    %c0_28 = arith.constant 0 : index
    %29 = vector.load %arg6[%c0_27, %c0_28] : memref<36x4xbf16, #tpu.memory_space<vmem>>, vector<36x4xbf16>
    %cst_29 = arith.constant dense<0.000000e+00> : vector<144x4xf32>
    %30 = tpu.matmul %28, %29, %cst_29 {dimension_numbers = #tpu.dot_dimension_numbers<[1], [0], [0], [1], [0, 0, 1, 1], [], []>} : vector<144x36xbf16>, vector<36x4xbf16>, vector<144x4xf32> -> vector<144x4xf32>
    %c0_30 = arith.constant 0 : index
    %c0_31 = arith.constant 0 : index
    %31 = vector.load %arg7[%c0_30, %c0_31] : memref<1x4xf32, #tpu.memory_space<vmem>>, vector<1x4xf32>
    %32 = vector.broadcast %31 : vector<1x4xf32> to vector<144x4xf32>
    %33 = arith.addf %30, %32 : vector<144x4xf32>
    %cst_32 = arith.constant 0.000000e+00 : f32
    %34 = vector.broadcast %cst_32 : f32 to vector<144x4xf32>
    %35 = arith.maximumf %33, %34 : vector<144x4xf32>
    %36 = arith.truncf %35 : vector<144x4xf32> to vector<144x4xbf16>
    %c0_33 = arith.constant 0 : index
    %c0_34 = arith.constant 0 : index
    %37 = vector.load %arg8[%c0_33, %c0_34] : memref<4x4xbf16, #tpu.memory_space<vmem>>, vector<4x4xbf16>
    %cst_35 = arith.constant dense<0.000000e+00> : vector<144x4xf32>
    %38 = tpu.matmul %36, %37, %cst_35 {dimension_numbers = #tpu.dot_dimension_numbers<[1], [0], [0], [1], [0, 0, 1, 1], [], []>} : vector<144x4xbf16>, vector<4x4xbf16>, vector<144x4xf32> -> vector<144x4xf32>
    %c0_36 = arith.constant 0 : index
    %c0_37 = arith.constant 0 : index
    %39 = vector.load %arg9[%c0_36, %c0_37] : memref<1x4xf32, #tpu.memory_space<vmem>>, vector<1x4xf32>
    %40 = vector.broadcast %39 : vector<1x4xf32> to vector<144x4xf32>
    %41 = arith.addf %38, %40 : vector<144x4xf32>
    %42 = vector.extract_strided_slice %1 {offsets = [18, 0], sizes = [144, 4], strides = [1, 1]} : vector<180x4xbf16> to vector<144x4xbf16>
    %43 = arith.extf %42 : vector<144x4xbf16> to vector<144x4xf32>
    %44 = arith.addf %43, %41 : vector<144x4xf32>
    %cst_38 = arith.constant 0.000000e+00 : f32
    %45 = vector.broadcast %cst_38 : f32 to vector<144x4xf32>
    %46 = arith.maximumf %44, %45 : vector<144x4xf32>
    %c0_39 = arith.constant 0 : index
    %c0_40 = arith.constant 0 : index
    %c0_41 = arith.constant 0 : index
    %c0_42 = arith.constant 0 : index
    %47 = vector.load %arg10[%c0_39, %c0_40, %c0_41, %c0_42] : memref<1x1x144x4xf32, #tpu.memory_space<vmem>>, vector<1x1x144x4xf32>
    %48 = vector.shape_cast %47 : vector<1x1x144x4xf32> to vector<144x4xf32>
    %49 = vector.shape_cast %46 : vector<144x4xf32> to vector<1x1x144x4xf32>
    tpu.vector_store %arg10[%c0_39, %c0_40, %c0_41, %c0_42], %49 {strides = array<i32>} : memref<1x1x144x4xf32, #tpu.memory_space<vmem>>, vector<1x1x144x4xf32>,
    return
  }
  func.func @transform_0(%arg0: i32, %arg1: i32) -> (i32, i32, i32, i32) {
    %c0_i32 = arith.constant 0 : i32
    %c0_i32_0 = arith.constant 0 : i32
    %c0_i32_1 = arith.constant 0 : i32
    return %arg0, %arg1, %c0_i32, %c0_i32_0 : i32, i32, i32, i32
  }
  func.func @transform_1(%arg0: i32, %arg1: i32) -> (i32, i32, i32) {
    %c0_i32 = arith.constant 0 : i32
    %c0_i32_0 = arith.constant 0 : i32
    %c0_i32_1 = arith.constant 0 : i32
    return %arg1, %c0_i32, %c0_i32_0 : i32, i32, i32
  }
  func.func @transform_2(%arg0: i32, %arg1: i32) -> (i32, i32) {
    %c0_i32 = arith.constant 0 : i32
    %c0_i32_0 = arith.constant 0 : i32
    %c0_i32_1 = arith.constant 0 : i32
    return %c0_i32, %c0_i32_0 : i32, i32
  }
  func.func @transform_3(%arg0: i32, %arg1: i32) -> (i32, i32) {
    %c0_i32 = arith.constant 0 : i32
    %c0_i32_0 = arith.constant 0 : i32
    %c0_i32_1 = arith.constant 0 : i32
    return %c0_i32, %c0_i32_0 : i32, i32
  }
  func.func @transform_4(%arg0: i32, %arg1: i32) -> (i32, i32) {
    %c0_i32 = arith.constant 0 : i32
    %c0_i32_0 = arith.constant 0 : i32
    %c0_i32_1 = arith.constant 0 : i32
    return %c0_i32, %c0_i32_0 : i32, i32
  }
  func.func @transform_5(%arg0: i32, %arg1: i32) -> (i32, i32) {
    %c0_i32 = arith.constant 0 : i32
    %c0_i32_0 = arith.constant 0 : i32
    %c0_i32_1 = arith.constant 0 : i32
    return %c0_i32, %c0_i32_0 : i32, i32
  }
  func.func @transform_6(%arg0: i32, %arg1: i32) -> (i32, i32) {
    %c0_i32 = arith.constant 0 : i32
    %c0_i32_0 = arith.constant 0 : i32
    %c0_i32_1 = arith.constant 0 : i32
    return %c0_i32, %c0_i32_0 : i32, i32
  }
  func.func @transform_7(%arg0: i32, %arg1: i32) -> (i32, i32) {
    %c0_i32 = arith.constant 0 : i32
    %c0_i32_0 = arith.constant 0 : i32
    %c0_i32_1 = arith.constant 0 : i32
    return %c0_i32, %c0_i32_0 : i32, i32
  }
  func.func @transform_8(%arg0: i32, %arg1: i32) -> (i32, i32, i32, i32) {
    %c0_i32 = arith.constant 0 : i32
    %c0_i32_0 = arith.constant 0 : i32
    %c0_i32_1 = arith.constant 0 : i32
    return %arg0, %arg1, %c0_i32, %c0_i32_0 : i32, i32, i32, i32
  }
}

</mosaic_0001>

<llo_original>
// kernel: tpu_custom_call.1
$region0: #{tpu_custom_call.1}
  #allocation0 [shape = 'u32[]', space=smem, size = 0x4, offset = 0x4, fixed_abs, tag = 'smem constant byte address 0x4 - core index']
  #allocation1 [shape = 'u32[144,128]{1,0:T(1,128)}', space=vmem, size = 0x12000, scoped, tag = 'internal scratch']
  #allocation2 [shape = 'f32[196,4]{1,0:T(8,128)}', space=vmem, size = 0x19000, scoped, tag = 'scratch operand']
  %s0 = inlined_call_operand.vmem [shape: bf16[2,2,180,4], index: 0, kind: input, shape index: {}]
  %s1 = inlined_call_operand.vmem [shape: f32[2,180,1], index: 1, kind: input, shape index: {}]
  %s2 = inlined_call_operand.vmem [shape: bf16[4,4], index: 2, kind: input, shape index: {}]
  %s3 = inlined_call_operand.vmem [shape: f32[1,4], index: 3, kind: input, shape index: {}]
  %s4 = inlined_call_operand.vmem [shape: bf16[36,4], index: 4, kind: input, shape index: {}]
  %s5 = inlined_call_operand.vmem [shape: f32[1,4], index: 5, kind: input, shape index: {}]
  %s6 = inlined_call_operand.vmem [shape: bf16[4,4], index: 6, kind: input, shape index: {}]
  %s7 = inlined_call_operand.vmem [shape: f32[1,4], index: 7, kind: input, shape index: {}]
  %s8 = inlined_call_operand.vmem [shape: f32[2,2,144,4], index: 8, kind: output, shape index: {}]
  %s9 = sld [smem:[#allocation0]]
  $region65: #{tpu_custom_call.1} parent=0
    _
  %s11 = ssub.s32 1, %s9
  %s12 = scalar_select 0, %s11, %s9
  loop: start=0, step=1, limit=6
  $region2: #{tpu_custom_call.1} parent=0 // loop_pre_header
    _
  $region3: #{tpu_custom_call.1} parent=0 // loop_header
    %s14 = sphi 0, %s18
    %p15 = scmp.ge.s32.totalorder %s14, 6
    %s21 = sphi 0, %s33
    %s22 = sphi 0, %s29
    %s23 = sphi 0, %s21
    %s24 = sphi 0, %s22
    %s25 = sphi 0, %s23
    %s26 = sphi 0, %s24
    %s38 = sphi 0, %s40
    %s41 = sphi 0, %s38
    %s42 = sphi 0, %s41
    %s58 = sphi 0, %s42
    %s64 = sphi 0, %s66
    %s67 = sphi 0, %s64
    %s68 = sphi 0, %s67
    %s84 = sphi 0, %s68
    %s88 = sphi 0, %s88
    %s90 = sphi 0, %s88
    %s91 = sphi 0, %s90
    %s105 = sphi 0, %s91
    %s109 = sphi 0, %s109
    %s111 = sphi 0, %s109
    %s112 = sphi 0, %s111
    %s126 = sphi 0, %s112
    %s130 = sphi 0, %s130
    %s132 = sphi 0, %s130
    %s133 = sphi 0, %s132
    %s147 = sphi 0, %s133
    %s151 = sphi 0, %s151
    %s153 = sphi 0, %s151
    %s154 = sphi 0, %s153
    %s168 = sphi 0, %s154
    %s172 = sphi 0, %s172
    %s174 = sphi 0, %s172
    %s175 = sphi 0, %s174
    %s189 = sphi 0, %s175
    %s193 = sphi 0, %s193
    %s195 = sphi 0, %s193
    %s196 = sphi 0, %s195
    %s210 = sphi 0, %s196
    %s218 = sphi 0, %s220
    %s221 = sphi 0, %s218
    %s222 = sphi 0, %s221
    %s238 = sphi 0, %s222
  $region4: #{tpu_custom_call.1} parent=0 // loop_header_branch
    %17 = sbr.rel (%p15) target = $region8
  $region5: #{tpu_custom_call.1} parent=0 // loop_body
    %s19 = ssub.s32 %s14, 1
    %s20 = ssub.s32 %s14, 2
    %s27 = sadd.s32 1, %s22
    %p28 = scmp.ge.s32.totalorder %s27, 2
    %s29 = scalar_select %p28, 0, %s27
    %s30 = sadd.s32 1, %s21
    %s31 = scalar_select %p28, %s30, %s21
    %p32 = scmp.ge.s32.totalorder %s31, 2
    %s33 = scalar_select %p32, 0, %s31
    %s34 = ssub.s32 %s21, %s33
    %s35 = ssub.s32 %s22, %s29
    %s36 = sor.u32 %s34, %s35
    %p37 = scmp.eq.s32.totalorder %s36, 0
    %s39 = sadd.s32 %s38, 1
    %s40 = scalar_select %p37, %s38, %s39
    %p43 = pneg %p37
    %p44 = scmp.eq.s32.totalorder %s14, 3
    %p45 = por %p43, %p44
    %p46 = scmp.ne.s32.totalorder %s38, %s41
    %p47 = scmp.eq.s32.totalorder %s14, 0
    %p48 = por %p46, %p47
    %p49 = scmp.ne.s32.totalorder %s38, %s41
    %p50 = scmp.eq.s32.totalorder %s19, 3
    %p51 = por %p49, %p50
    %p52 = scmp.ne.s32.totalorder %s41, %s42
    %p53 = scmp.eq.s32.totalorder %s19, 0
    %p54 = por %p52, %p53
    %p55 = scmp.ne.s32.totalorder %s41, %s42
    %p56 = scmp.eq.s32.totalorder %s20, 3
    %p57 = por %p55, %p56
    %p59 = scmp.ne.s32.totalorder %s42, %s58
    %p60 = scmp.eq.s32.totalorder %s20, 0
    %p61 = por %p59, %p60
    %s62 = ssub.s32 %s22, %s29
    %p63 = scmp.eq.s32.totalorder %s62, 0
    %s65 = sadd.s32 %s64, 1
    %s66 = scalar_select %p63, %s64, %s65
    %p69 = pneg %p63
    %p70 = scmp.eq.s32.totalorder %s14, 3
    %p71 = por %p69, %p70
    %p72 = scmp.ne.s32.totalorder %s64, %s67
    %p73 = scmp.eq.s32.totalorder %s14, 0
    %p74 = por %p72, %p73
    %p75 = scmp.ne.s32.totalorder %s64, %s67
    %p76 = scmp.eq.s32.totalorder %s19, 3
    %p77 = por %p75, %p76
    %p78 = scmp.ne.s32.totalorder %s67, %s68
    %p79 = scmp.eq.s32.totalorder %s19, 0
    %p80 = por %p78, %p79
    %p81 = scmp.ne.s32.totalorder %s67, %s68
    %p82 = scmp.eq.s32.totalorder %s20, 3
    %p83 = por %p81, %p82
    %p85 = scmp.ne.s32.totalorder %s68, %s84
    %p86 = scmp.eq.s32.totalorder %s20, 0
    %p87 = por %p85, %p86
    %s89 = sadd.s32 %s88, 1
    %p92 = scmp.eq.s32.totalorder %s14, 3
    %p93 = scmp.ne.s32.totalorder %s88, %s90
    %p94 = scmp.eq.s32.totalorder %s14, 0
    %p95 = por %p93, %p94
    %p96 = scmp.ne.s32.totalorder %s88, %s90
    %p97 = scmp.eq.s32.totalorder %s19, 3
    %p98 = por %p96, %p97
    %p99 = scmp.ne.s32.totalorder %s90, %s91
    %p100 = scmp.eq.s32.totalorder %s19, 0
    %p101 = por %p99, %p100
    %p102 = scmp.ne.s32.totalorder %s90, %s91
    %p103 = scmp.eq.s32.totalorder %s20, 3
    %p104 = por %p102, %p103
    %p106 = scmp.ne.s32.totalorder %s91, %s105
    %p107 = scmp.eq.s32.totalorder %s20, 0
    %p108 = por %p106, %p107
    %s110 = sadd.s32 %s109, 1
    %p113 = scmp.eq.s32.totalorder %s14, 3
    %p114 = scmp.ne.s32.totalorder %s109, %s111
    %p115 = scmp.eq.s32.totalorder %s14, 0
    %p116 = por %p114, %p115
    %p117 = scmp.ne.s32.totalorder %s109, %s111
    %p118 = scmp.eq.s32.totalorder %s19, 3
    %p119 = por %p117, %p118
    %p120 = scmp.ne.s32.totalorder %s111, %s112
    %p121 = scmp.eq.s32.totalorder %s19, 0
    %p122 = por %p120, %p121
    %p123 = scmp.ne.s32.totalorder %s111, %s112
    %p124 = scmp.eq.s32.totalorder %s20, 3
    %p125 = por %p123, %p124
    %p127 = scmp.ne.s32.totalorder %s112, %s126
    %p128 = scmp.eq.s32.totalorder %s20, 0
    %p129 = por %p127, %p128
    %s131 = sadd.s32 %s130, 1
    %p134 = scmp.eq.s32.totalorder %s14, 3
    %p135 = scmp.ne.s32.totalorder %s130, %s132
    %p136 = scmp.eq.s32.totalorder %s14, 0
    %p137 = por %p135, %p136
    %p138 = scmp.ne.s32.totalorder %s130, %s132
    %p139 = scmp.eq.s32.totalorder %s19, 3
    %p140 = por %p138, %p139
    %p141 = scmp.ne.s32.totalorder %s132, %s133
    %p142 = scmp.eq.s32.totalorder %s19, 0
    %p143 = por %p141, %p142
    %p144 = scmp.ne.s32.totalorder %s132, %s133
    %p145 = scmp.eq.s32.totalorder %s20, 3
    %p146 = por %p144, %p145
    %p148 = scmp.ne.s32.totalorder %s133, %s147
    %p149 = scmp.eq.s32.totalorder %s20, 0
    %p150 = por %p148, %p149
    %s152 = sadd.s32 %s151, 1
    %p155 = scmp.eq.s32.totalorder %s14, 3
    %p156 = scmp.ne.s32.totalorder %s151, %s153
    %p157 = scmp.eq.s32.totalorder %s14, 0
    %p158 = por %p156, %p157
    %p159 = scmp.ne.s32.totalorder %s151, %s153
    %p160 = scmp.eq.s32.totalorder %s19, 3
    %p161 = por %p159, %p160
    %p162 = scmp.ne.s32.totalorder %s153, %s154
    %p163 = scmp.eq.s32.totalorder %s19, 0
    %p164 = por %p162, %p163
    %p165 = scmp.ne.s32.totalorder %s153, %s154
    %p166 = scmp.eq.s32.totalorder %s20, 3
    %p167 = por %p165, %p166
    %p169 = scmp.ne.s32.totalorder %s154, %s168
    %p170 = scmp.eq.s32.totalorder %s20, 0
    %p171 = por %p169, %p170
    %s173 = sadd.s32 %s172, 1
    %p176 = scmp.eq.s32.totalorder %s14, 3
    %p177 = scmp.ne.s32.totalorder %s172, %s174
    %p178 = scmp.eq.s32.totalorder %s14, 0
    %p179 = por %p177, %p178
    %p180 = scmp.ne.s32.totalorder %s172, %s174
    %p181 = scmp.eq.s32.totalorder %s19, 3
    %p182 = por %p180, %p181
    %p183 = scmp.ne.s32.totalorder %s174, %s175
    %p184 = scmp.eq.s32.totalorder %s19, 0
    %p185 = por %p183, %p184
    %p186 = scmp.ne.s32.totalorder %s174, %s175
    %p187 = scmp.eq.s32.totalorder %s20, 3
    %p188 = por %p186, %p187
    %p190 = scmp.ne.s32.totalorder %s175, %s189
    %p191 = scmp.eq.s32.totalorder %s20, 0
    %p192 = por %p190, %p191
    %s194 = sadd.s32 %s193, 1
    %p197 = scmp.eq.s32.totalorder %s14, 3
    %p198 = scmp.ne.s32.totalorder %s193, %s195
    %p199 = scmp.eq.s32.totalorder %s14, 0
    %p200 = por %p198, %p199
    %p201 = scmp.ne.s32.totalorder %s193, %s195
    %p202 = scmp.eq.s32.totalorder %s19, 3
    %p203 = por %p201, %p202
    %p204 = scmp.ne.s32.totalorder %s195, %s196
    %p205 = scmp.eq.s32.totalorder %s19, 0
    %p206 = por %p204, %p205
    %p207 = scmp.ne.s32.totalorder %s195, %s196
    %p208 = scmp.eq.s32.totalorder %s20, 3
    %p209 = por %p207, %p208
    %p211 = scmp.ne.s32.totalorder %s196, %s210
    %p212 = scmp.eq.s32.totalorder %s20, 0
    %p213 = por %p211, %p212
    %s214 = ssub.s32 %s21, %s33
    %s215 = ssub.s32 %s22, %s29
    %s216 = sor.u32 %s214, %s215
    %p217 = scmp.eq.s32.totalorder %s216, 0
    %s219 = sadd.s32 %s218, 1
    %s220 = scalar_select %p217, %s218, %s219
    %p223 = pneg %p217
    %p224 = scmp.eq.s32.totalorder %s14, 3
    %p225 = por %p223, %p224
    %p226 = scmp.ne.s32.totalorder %s218, %s221
    %p227 = scmp.eq.s32.totalorder %s14, 0
    %p228 = por %p226, %p227
    %p229 = scmp.ne.s32.totalorder %s218, %s221
    %p230 = scmp.eq.s32.totalorder %s19, 3
    %p231 = por %p229, %p230
    %p232 = scmp.ne.s32.totalorder %s221, %s222
    %p233 = scmp.eq.s32.totalorder %s19, 0
    %p234 = por %p232, %p233
    %p235 = scmp.ne.s32.totalorder %s221, %s222
    %p236 = scmp.eq.s32.totalorder %s20, 3
    %p237 = por %p235, %p236
    %p239 = scmp.ne.s32.totalorder %s222, %s238
    %p240 = scmp.eq.s32.totalorder %s20, 0
    %p241 = por %p239, %p240
    %p242 = scmp.le.s32.totalorder 1, %s14
    %p243 = scmp.lt.s32.totalorder %s14, 5
    %p244 = pnand %p242, %p243
    %p245 = pneg %p244
    // Predicated region
    $region9: #{tpu_custom_call.1} parent=5 // pred_check
      _
    $region10: #{tpu_custom_call.1} parent=5 // pred_check_branch
      %247 = sbr.rel (%p244) target = $region12
    $region11: #{tpu_custom_call.1} parent=5 // pred_region
      %s248 = ssub.s32 %s14, 1
      // Predicated region
      $region13: #{tpu_custom_call.1} parent=11 // pred_check
        %p249 = pneg %p101
      $region14: #{tpu_custom_call.1} parent=11 // pred_check_branch
        %251 = sbr.rel (%p249) target = $region16
      $region15: #{tpu_custom_call.1} parent=11 // pred_region
        _
      $region16: #{tpu_custom_call.1} parent=11 // pred_fallthru
        _
      // Predicated region
      $region17: #{tpu_custom_call.1} parent=11 // pred_check
        %p252 = pneg %p122
      $region18: #{tpu_custom_call.1} parent=11 // pred_check_branch
        %254 = sbr.rel (%p252) target = $region20
      $region19: #{tpu_custom_call.1} parent=11 // pred_region
        _
      $region20: #{tpu_custom_call.1} parent=11 // pred_fallthru
        _
      // Predicated region
      $region21: #{tpu_custom_call.1} parent=11 // pred_check
        %p255 = pneg %p143
      $region22: #{tpu_custom_call.1} parent=11 // pred_check_branch
        %257 = sbr.rel (%p255) target = $region24
      $region23: #{tpu_custom_call.1} parent=11 // pred_region
        _
      $region24: #{tpu_custom_call.1} parent=11 // pred_fallthru
        _
      // Predicated region
      $region25: #{tpu_custom_call.1} parent=11 // pred_check
        %p258 = pneg %p164
      $region26: #{tpu_custom_call.1} parent=11 // pred_check_branch
        %260 = sbr.rel (%p258) target = $region28
      $region27: #{tpu_custom_call.1} parent=11 // pred_region
        _
      $region28: #{tpu_custom_call.1} parent=11 // pred_fallthru
        _
      // Predicated region
      $region29: #{tpu_custom_call.1} parent=11 // pred_check
        %p261 = pneg %p185
      $region30: #{tpu_custom_call.1} parent=11 // pred_check_branch
        %263 = sbr.rel (%p261) target = $region32
      $region31: #{tpu_custom_call.1} parent=11 // pred_region
        _
      $region32: #{tpu_custom_call.1} parent=11 // pred_fallthru
        _
      // Predicated region
      $region33: #{tpu_custom_call.1} parent=11 // pred_check
        %p264 = pneg %p206
      $region34: #{tpu_custom_call.1} parent=11 // pred_check_branch
        %266 = sbr.rel (%p264) target = $region36
      $region35: #{tpu_custom_call.1} parent=11 // pred_region
        _
      $region36: #{tpu_custom_call.1} parent=11 // pred_fallthru
        _
    $region12: #{tpu_custom_call.1} parent=5 // pred_fallthru
      _
    %p267 = scmp.lt.s32.totalorder %s14, 4
    // Predicated region
    $region37: #{tpu_custom_call.1} parent=5 // pred_check
      %p268 = pneg %p267
    $region38: #{tpu_custom_call.1} parent=5 // pred_check_branch
      %270 = sbr.rel (%p268) target = $region40
    $region39: #{tpu_custom_call.1} parent=5 // pred_region
      // Predicated region
      $region41: #{tpu_custom_call.1} parent=39 // pred_check
        %p271 = pneg %p48
      $region42: #{tpu_custom_call.1} parent=39 // pred_check_branch
        %273 = sbr.rel (%p271) target = $region44
      $region43: #{tpu_custom_call.1} parent=39 // pred_region
        %p274 = scmp.lt.s32.totalorder %s21, 1
        %s275 = scalar_select %p274, %s21, 1
        %p276 = scmp.lt.s32.totalorder %s22, 1
        %s277 = scalar_select %p276, %s22, 1
        %s278 = smul.addr %s277, 23
        %s279 = smul.addr %s275, 46
        %s280 = sadd.s32 %s278, %s279
        %s281 = smul.addr %s280, 4
        %s282 = scalar_lea.vmem %s0, %s281
      $region44: #{tpu_custom_call.1} parent=39 // pred_fallthru
        _
      // Predicated region
      $region45: #{tpu_custom_call.1} parent=39 // pred_check
        %p283 = pneg %p74
      $region46: #{tpu_custom_call.1} parent=39 // pred_check_branch
        %285 = sbr.rel (%p283) target = $region48
      $region47: #{tpu_custom_call.1} parent=39 // pred_region
        %p286 = scmp.lt.s32.totalorder %s22, 1
        %s287 = scalar_select %p286, %s22, 1
        %s288 = smul.addr %s287, 23
        %s289 = smul.addr %s288, 8
        %s290 = scalar_lea.vmem %s1, %s289
      $region48: #{tpu_custom_call.1} parent=39 // pred_fallthru
        _
    $region40: #{tpu_custom_call.1} parent=5 // pred_fallthru
      _
    %p291 = scmp.le.s32.totalorder 1, %s14
    %p292 = scmp.lt.s32.totalorder %s14, 5
    %p293 = pnand %p291, %p292
    %p294 = pneg %p293
    // Predicated region
    $region49: #{tpu_custom_call.1} parent=5 // pred_check
      _
    $region50: #{tpu_custom_call.1} parent=5 // pred_check_branch
      %296 = sbr.rel (%p293) target = $region52
    $region51: #{tpu_custom_call.1} parent=5 // pred_region
      %s297 = ssub.s32 %s14, 1
      %p298 = scmp.lt.s32.totalorder %s23, 1
      %s299 = scalar_select %p298, %s23, 1
      %p300 = scmp.lt.s32.totalorder %s24, 1
      %s301 = scalar_select %p300, %s24, 1
      %s302 = smul.addr %s301, 23
      %s303 = smul.addr %s299, 46
      %s304 = sadd.s32 %s302, %s303
      %s305 = smul.addr %s304, 4
      %s306 = scalar_lea.vmem %s0, %s305
      %p307 = pneg %p54
      %p308 = pneg %p51
      %p309 = scmp.lt.s32.totalorder %s24, 1
      %s310 = scalar_select %p309, %s24, 1
      %s311 = smul.addr %s310, 23
      %s312 = smul.addr %s311, 8
      %s313 = scalar_lea.vmem %s1, %s312
      %p314 = pneg %p80
      %p315 = pneg %p77
      %p316 = pneg %p101
      %p317 = pneg %p98
      %p318 = pneg %p122
      %p319 = pneg %p119
      %p320 = pneg %p143
      %p321 = pneg %p140
      %p322 = pneg %p164
      %p323 = pneg %p161
      %p324 = pneg %p185
      %p325 = pneg %p182
      %p326 = pneg %p206
      %p327 = pneg %p203
      %p328 = pneg %p234
      %p329 = pneg %p231
      %p330 = scmp.lt.s32.totalorder %s23, 1
      %s331 = scalar_select %p330, %s23, 1
      %p332 = scmp.lt.s32.totalorder %s24, 1
      %s333 = scalar_select %p332, %s24, 1
      %s334 = smul.addr %s333, 18
      %s335 = smul.addr %s331, 36
      %s336 = sadd.s32 %s334, %s335
      %s337 = smul.addr %s336, 8
      %s338 = scalar_lea.vmem %s8, %s337
      %p339 = scmp.lt.s32.totalorder %s23, 1
      %s340 = scalar_select %p339, %s23, 1
      %p341 = scmp.lt.s32.totalorder %s24, 1
      %s342 = scalar_select %p341, %s24, 1
      %s343 = smul.addr %s342, 23
      %s344 = smul.addr %s340, 46
      %s345 = sadd.s32 %s343, %s344
      %s346 = smul.addr %s345, 4
      %s347 = scalar_lea.vmem %s0, %s346
      %p348 = scmp.lt.s32.totalorder %s24, 1
      %s349 = scalar_select %p348, %s24, 1
      %s350 = smul.addr %s349, 23
      %s351 = smul.addr %s350, 8
      %s352 = scalar_lea.vmem %s1, %s351
      %p353 = scmp.lt.s32.totalorder %s23, 1
      %s354 = scalar_select %p353, %s23, 1
      %p355 = scmp.lt.s32.totalorder %s24, 1
      %s356 = scalar_select %p355, %s24, 1
      %s357 = smul.addr %s356, 18
      %s358 = smul.addr %s354, 36
      %s359 = sadd.s32 %s357, %s358
      %s360 = smul.addr %s359, 8
      %s361 = scalar_lea.vmem %s8, %s360
      %v363 = vld [vmem:[%s347] sm:$0xf]
      %v364 = vld [vmem:[%s347 + $0x4] sm:$0xf]
      %v365 = vld [vmem:[%s347 + $0x8] sm:$0xf]
      %v366 = vld [vmem:[%s347 + $0xc] sm:$0xf]
      %v367 = vld [vmem:[%s347 + $0x10] sm:$0xf]
      %v368 = vld [vmem:[%s347 + $0x14] sm:$0xf]
      %v369 = vld [vmem:[%s347 + $0x18] sm:$0xf]
      %v370 = vld [vmem:[%s347 + $0x1c] sm:$0xf]
      %v371 = vld [vmem:[%s347 + $0x20] sm:$0xf]
      %v372 = vld [vmem:[%s347 + $0x24] sm:$0xf]
      %v373 = vld [vmem:[%s347 + $0x28] sm:$0xf]
      %v374 = vld [vmem:[%s347 + $0x2c] sm:$0xf]
      %v375 = vld [vmem:[%s347 + $0x30] sm:$0xf]
      %v376 = vld [vmem:[%s347 + $0x34] sm:$0xf]
      %v377 = vld [vmem:[%s347 + $0x38] sm:$0xf]
      %v378 = vld [vmem:[%s347 + $0x3c] sm:$0xf]
      %v379 = vld [vmem:[%s347 + $0x40] sm:$0xf]
      %v380 = vld [vmem:[%s347 + $0x44] sm:$0xf]
      %v381 = vld [vmem:[%s347 + $0x48] sm:$0xf]
      %v382 = vld [vmem:[%s347 + $0x4c] sm:$0xf]
      %v383 = vld [vmem:[%s347 + $0x50] sm:$0xf]
      %v384 = vld [vmem:[%s347 + $0x54] sm:$0xf]
      %v385 = vld [vmem:[%s347 + $0x58] sm:$0x3]
      %v386 = vld [vmem:[%s352] sm:$0xff]
      %v387 = vld [vmem:[%s352 + $0x8] sm:$0xff]
      %v388 = vld [vmem:[%s352 + $0x10] sm:$0xff]
      %v389 = vld [vmem:[%s352 + $0x18] sm:$0xff]
      %v390 = vld [vmem:[%s352 + $0x20] sm:$0xff]
      %v391 = vld [vmem:[%s352 + $0x28] sm:$0xff]
      %v392 = vld [vmem:[%s352 + $0x30] sm:$0xff]
      %v393 = vld [vmem:[%s352 + $0x38] sm:$0xff]
      %v394 = vld [vmem:[%s352 + $0x40] sm:$0xff]
      %v395 = vld [vmem:[%s352 + $0x48] sm:$0xff]
      %v396 = vld [vmem:[%s352 + $0x50] sm:$0xff]
      %v397 = vld [vmem:[%s352 + $0x58] sm:$0xff]
      %v398 = vld [vmem:[%s352 + $0x60] sm:$0xff]
      %v399 = vld [vmem:[%s352 + $0x68] sm:$0xff]
      %v400 = vld [vmem:[%s352 + $0x70] sm:$0xff]
      %v401 = vld [vmem:[%s352 + $0x78] sm:$0xff]
      %v402 = vld [vmem:[%s352 + $0x80] sm:$0xff]
      %v403 = vld [vmem:[%s352 + $0x88] sm:$0xff]
      %v404 = vld [vmem:[%s352 + $0x90] sm:$0xff]
      %v405 = vld [vmem:[%s352 + $0x98] sm:$0xff]
      %v406 = vld [vmem:[%s352 + $0xa0] sm:$0xff]
      %v407 = vld [vmem:[%s352 + $0xa8] sm:$0xff]
      %v408 = vld [vmem:[%s352 + $0xb0] sm:$0xf]
      %v409 = vld [vmem:[%s2] sm:$0x3]
      %v410 = vld [vmem:[%s3] sm:$0x1]
      %v412 = vlaneseq
      %v413 = vshrl.u32 %v412, 7
      %v414 = vsub.s32 0, %v413
      %v415 = vrot.slane %v410, %v414
      %v440 = vunpack.c.l.b16 %v363
      %v441 = vunpack.c.l.b16 %v364
      %v442 = vunpack.c.l.b16 %v365
      %v443 = vunpack.c.l.b16 %v366
      %v444 = vunpack.c.l.b16 %v367
      %v445 = vunpack.c.l.b16 %v368
      %v446 = vunpack.c.l.b16 %v369
      %v447 = vunpack.c.l.b16 %v370
      %v448 = vunpack.c.l.b16 %v371
      %v449 = vunpack.c.l.b16 %v372
      %v450 = vunpack.c.l.b16 %v373
      %v451 = vunpack.c.l.b16 %v374
      %v452 = vunpack.c.l.b16 %v375
      %v453 = vunpack.c.l.b16 %v376
      %v454 = vunpack.c.l.b16 %v377
      %v455 = vunpack.c.l.b16 %v378
      %v456 = vunpack.c.l.b16 %v379
      %v457 = vunpack.c.l.b16 %v380
      %v458 = vunpack.c.l.b16 %v381
      %v459 = vunpack.c.l.b16 %v382
      %v460 = vunpack.c.l.b16 %v383
      %v461 = vunpack.c.l.b16 %v384
      %v462 = vunpack.c.l.b16 %v385
      %v463 = vpack.c.b16 %v441, %v440
      %v464 = vpack.c.b16 %v443, %v442
      %v465 = vpack.c.b16 %v445, %v444
      %v466 = vpack.c.b16 %v447, %v446
      %v467 = vpack.c.b16 %v449, %v448
      %v468 = vpack.c.b16 %v451, %v450
      %v469 = vpack.c.b16 %v453, %v452
      %v470 = vpack.c.b16 %v455, %v454
      %v471 = vpack.c.b16 %v457, %v456
      %v472 = vpack.c.b16 %v459, %v458
      %v473 = vpack.c.b16 %v461, %v460
      %v474 = vpack.c.b16 %v462, %v462
      %vm475 = vcmask 31744
      %v477 = vsel %vm475, %v463, 0
      %v480 = vsel %vm475, %v464, 0
      %v483 = vsel %vm475, %v465, 0
      %v486 = vsel %vm475, %v466, 0
      %v489 = vsel %vm475, %v467, 0
      %v492 = vsel %vm475, %v468, 0
      %v495 = vsel %vm475, %v469, 0
      %v498 = vsel %vm475, %v470, 0
      %v501 = vsel %vm475, %v471, 0
      %v504 = vsel %vm475, %v472, 0
      %v507 = vsel %vm475, %v473, 0
      %v510 = vsel %vm475, %v474, 0
      %vm512 = vcmask 1041408
      %v514 = vsel %vm512, %v409, 0
      %516 = vmatprep.subr.bf16.mxu0 0
      %517 = vmatpush1.bf16.msra.mxu0 %v514
      %518 = vmatprep.subr.bf16.mxu0 0
      %519 = vmatpush1.bf16.msra.mxu0 0
      %520 = vmatprep.subr.bf16.mxu0 0
      %521 = vmatpush1.bf16.msra.mxu0 0
      %522 = vmatprep.subr.bf16.mxu0 0
      %523 = vmatpush1.bf16.msra.mxu0 0
      %524 = vmatprep.subr.bf16.mxu0 0
      %525 = vmatpush1.bf16.msra.mxu0 0
      %526 = vmatprep.subr.bf16.mxu0 0
      %527 = vmatpush1.bf16.msra.mxu0 0
      %528 = vmatprep.subr.bf16.mxu0 0
      %529 = vmatpush1.bf16.msra.mxu0 0
      %530 = vmatprep.subr.bf16.mxu0 0
      %531 = vmatpush1.bf16.msra.mxu0 0
      %532 = vmatprep.subr.bf16.mxu0 0
      %533 = vmatpush1.bf16.msra.mxu0 0
      %534 = vmatprep.subr.bf16.mxu0 0
      %535 = vmatpush1.bf16.msra.mxu0 0
      %536 = vmatprep.subr.bf16.mxu0 0
      %537 = vmatpush1.bf16.msra.mxu0 0
      %538 = vmatprep.subr.bf16.mxu0 0
      %539 = vmatpush1.bf16.msra.mxu0 0
      %540 = vmatprep.subr.bf16.mxu0 0
      %541 = vmatpush1.bf16.msra.mxu0 0
      %542 = vmatprep.subr.bf16.mxu0 0
      %543 = vmatpush1.bf16.msra.mxu0 0
      %544 = vmatprep.subr.bf16.mxu0 0
      %545 = vmatpush1.bf16.msra.mxu0 0
      %546 = vmatprep.subr.bf16.mxu0 0
      %547 = vmatpush1.bf16.msra.mxu0 0
      %548 = vmatprep.mubr.bf16.mxu0 0
      %549 = vmatmul.mubr.bf16.gmra.mrb[0].mxu0 %v477
      %v550 = vpop.f32.mrb[0].mxu0
      %v551 = vadd.f32 %v415, %v550
      %v552 = vpop.f32.mrb[0].mxu0
      %v553 = vpop.f32.mrb[0].mxu0
      %v554 = vadd.f32 %v415, %v553
      %v555 = vpop.f32.mrb[0].mxu0
      %556 = vmatprep.mubr.bf16.mxu0 0
      %557 = vmatmul.mubr.bf16.gmra.mrb[0].mxu0 %v480
      %v558 = vpop.f32.mrb[0].mxu0
      %v559 = vadd.f32 %v415, %v558
      %v560 = vpop.f32.mrb[0].mxu0
      %v561 = vpop.f32.mrb[0].mxu0
      %v562 = vadd.f32 %v415, %v561
      %v563 = vpop.f32.mrb[0].mxu0
      %564 = vmatprep.mubr.bf16.mxu0 0
      %565 = vmatmul.mubr.bf16.gmra.mrb[0].mxu0 %v483
      %v566 = vpop.f32.mrb[0].mxu0
      %v567 = vadd.f32 %v415, %v566
      %v568 = vpop.f32.mrb[0].mxu0
      %v569 = vpop.f32.mrb[0].mxu0
      %v570 = vadd.f32 %v415, %v569
      %v571 = vpop.f32.mrb[0].mxu0
      %572 = vmatprep.mubr.bf16.mxu0 0
      %573 = vmatmul.mubr.bf16.gmra.mrb[0].mxu0 %v486
      %v574 = vpop.f32.mrb[0].mxu0
      %v575 = vadd.f32 %v415, %v574
      %v576 = vpop.f32.mrb[0].mxu0
      %v577 = vpop.f32.mrb[0].mxu0
      %v578 = vadd.f32 %v415, %v577
      %v579 = vpop.f32.mrb[0].mxu0
      %580 = vmatprep.mubr.bf16.mxu0 0
      %581 = vmatmul.mubr.bf16.gmra.mrb[0].mxu0 %v489
      %v582 = vpop.f32.mrb[0].mxu0
      %v583 = vadd.f32 %v415, %v582
      %v584 = vpop.f32.mrb[0].mxu0
      %v585 = vpop.f32.mrb[0].mxu0
      %v586 = vadd.f32 %v415, %v585
      %v587 = vpop.f32.mrb[0].mxu0
      %588 = vmatprep.mubr.bf16.mxu0 0
      %589 = vmatmul.mubr.bf16.gmra.mrb[0].mxu0 %v492
      %v590 = vpop.f32.mrb[0].mxu0
      %v591 = vadd.f32 %v415, %v590
      %v592 = vpop.f32.mrb[0].mxu0
      %v593 = vpop.f32.mrb[0].mxu0
      %v594 = vadd.f32 %v415, %v593
      %v595 = vpop.f32.mrb[0].mxu0
      %596 = vmatprep.mubr.bf16.mxu0 0
      %597 = vmatmul.mubr.bf16.gmra.mrb[0].mxu0 %v495
      %v598 = vpop.f32.mrb[0].mxu0
      %v599 = vadd.f32 %v415, %v598
      %v600 = vpop.f32.mrb[0].mxu0
      %v601 = vpop.f32.mrb[0].mxu0
      %v602 = vadd.f32 %v415, %v601
      %v603 = vpop.f32.mrb[0].mxu0
      %604 = vmatprep.mubr.bf16.mxu0 0
      %605 = vmatmul.mubr.bf16.gmra.mrb[0].mxu0 %v498
      %v606 = vpop.f32.mrb[0].mxu0
      %v607 = vadd.f32 %v415, %v606
      %v608 = vpop.f32.mrb[0].mxu0
      %v609 = vpop.f32.mrb[0].mxu0
      %v610 = vadd.f32 %v415, %v609
      %v611 = vpop.f32.mrb[0].mxu0
      %612 = vmatprep.mubr.bf16.mxu0 0
      %613 = vmatmul.mubr.bf16.gmra.mrb[0].mxu0 %v501
      %v614 = vpop.f32.mrb[0].mxu0
      %v615 = vadd.f32 %v415, %v614
      %v616 = vpop.f32.mrb[0].mxu0
      %v617 = vpop.f32.mrb[0].mxu0
      %v618 = vadd.f32 %v415, %v617
      %v619 = vpop.f32.mrb[0].mxu0
      %620 = vmatprep.mubr.bf16.mxu0 0
      %621 = vmatmul.mubr.bf16.gmra.mrb[0].mxu0 %v504
      %v622 = vpop.f32.mrb[0].mxu0
      %v623 = vadd.f32 %v415, %v622
      %v624 = vpop.f32.mrb[0].mxu0
      %v625 = vpop.f32.mrb[0].mxu0
      %v626 = vadd.f32 %v415, %v625
      %v627 = vpop.f32.mrb[0].mxu0
      %628 = vmatprep.mubr.bf16.mxu0 0
      %629 = vmatmul.mubr.bf16.gmra.mrb[0].mxu0 %v507
      %v630 = vpop.f32.mrb[0].mxu0
      %v631 = vadd.f32 %v415, %v630
      %v632 = vpop.f32.mrb[0].mxu0
      %v633 = vpop.f32.mrb[0].mxu0
      %v634 = vadd.f32 %v415, %v633
      %v635 = vpop.f32.mrb[0].mxu0
      %636 = vmatprep.mubr.bf16.mxu0 0
      %637 = vmatmul.mubr.bf16.gmra.mrb[0].mxu0 %v510
      %v638 = vpop.f32.mrb[0].mxu0
      %v639 = vadd.f32 %v415, %v638
      %v640 = vpop.f32.mrb[0].mxu0
      %v641 = vpop.f32.mrb[0].mxu0
      %v642 = vpop.f32.mrb[0].mxu0
      %643 = vdwg.mxu0
      %v644 = vmax.f32 %v551, 0.0
      %v645 = vmax.f32 %v554, 0.0
      %v646 = vmax.f32 %v559, 0.0
      %v647 = vmax.f32 %v562, 0.0
      %v648 = vmax.f32 %v567, 0.0
      %v649 = vmax.f32 %v570, 0.0
      %v650 = vmax.f32 %v575, 0.0
      %v651 = vmax.f32 %v578, 0.0
      %v652 = vmax.f32 %v583, 0.0
      %v653 = vmax.f32 %v586, 0.0
      %v654 = vmax.f32 %v591, 0.0
      %v655 = vmax.f32 %v594, 0.0
      %v656 = vmax.f32 %v599, 0.0
      %v657 = vmax.f32 %v602, 0.0
      %v658 = vmax.f32 %v607, 0.0
      %v659 = vmax.f32 %v610, 0.0
      %v660 = vmax.f32 %v615, 0.0
      %v661 = vmax.f32 %v618, 0.0
      %v662 = vmax.f32 %v623, 0.0
      %v663 = vmax.f32 %v626, 0.0
      %v664 = vmax.f32 %v631, 0.0
      %v665 = vmax.f32 %v634, 0.0
      %v666 = vmax.f32 %v639, 0.0
      %668 = vset.pattern.permute.xlu0 0
      %669 = vperm.xlu0 %668, %v386
      %v670 = vpop.permute.xlu0 %669
      %673 = vset.pattern.permute.xlu0 0
      %674 = vperm.xlu0 %673, %v387
      %v675 = vpop.permute.xlu0 %674
      %678 = vset.pattern.permute.xlu0 0
      %679 = vperm.xlu0 %678, %v388
      %v680 = vpop.permute.xlu0 %679
      %683 = vset.pattern.permute.xlu0 0
      %684 = vperm.xlu0 %683, %v389
      %v685 = vpop.permute.xlu0 %684
      %688 = vset.pattern.permute.xlu0 0
      %689 = vperm.xlu0 %688, %v390
      %v690 = vpop.permute.xlu0 %689
      %693 = vset.pattern.permute.xlu0 0
      %694 = vperm.xlu0 %693, %v391
      %v695 = vpop.permute.xlu0 %694
      %698 = vset.pattern.permute.xlu0 0
      %699 = vperm.xlu0 %698, %v392
      %v700 = vpop.permute.xlu0 %699
      %703 = vset.pattern.permute.xlu0 0
      %704 = vperm.xlu0 %703, %v393
      %v705 = vpop.permute.xlu0 %704
      %708 = vset.pattern.permute.xlu0 0
      %709 = vperm.xlu0 %708, %v394
      %v710 = vpop.permute.xlu0 %709
      %713 = vset.pattern.permute.xlu0 0
      %714 = vperm.xlu0 %713, %v395
      %v715 = vpop.permute.xlu0 %714
      %718 = vset.pattern.permute.xlu0 0
      %719 = vperm.xlu0 %718, %v396
      %v720 = vpop.permute.xlu0 %719
      %723 = vset.pattern.permute.xlu0 0
      %724 = vperm.xlu0 %723, %v397
      %v725 = vpop.permute.xlu0 %724
      %728 = vset.pattern.permute.xlu0 0
      %729 = vperm.xlu0 %728, %v398
      %v730 = vpop.permute.xlu0 %729
      %733 = vset.pattern.permute.xlu0 0
      %734 = vperm.xlu0 %733, %v399
      %v735 = vpop.permute.xlu0 %734
      %738 = vset.pattern.permute.xlu0 0
      %739 = vperm.xlu0 %738, %v400
      %v740 = vpop.permute.xlu0 %739
      %743 = vset.pattern.permute.xlu0 0
      %744 = vperm.xlu0 %743, %v401
      %v745 = vpop.permute.xlu0 %744
      %748 = vset.pattern.permute.xlu0 0
      %749 = vperm.xlu0 %748, %v402
      %v750 = vpop.permute.xlu0 %749
      %753 = vset.pattern.permute.xlu0 0
      %754 = vperm.xlu0 %753, %v403
      %v755 = vpop.permute.xlu0 %754
      %758 = vset.pattern.permute.xlu0 0
      %759 = vperm.xlu0 %758, %v404
      %v760 = vpop.permute.xlu0 %759
      %763 = vset.pattern.permute.xlu0 0
      %764 = vperm.xlu0 %763, %v405
      %v765 = vpop.permute.xlu0 %764
      %768 = vset.pattern.permute.xlu0 0
      %769 = vperm.xlu0 %768, %v406
      %v770 = vpop.permute.xlu0 %769
      %773 = vset.pattern.permute.xlu0 0
      %774 = vperm.xlu0 %773, %v407
      %v775 = vpop.permute.xlu0 %774
      %778 = vset.pattern.permute.xlu0 0
      %779 = vperm.xlu0 %778, %v408
      %v780 = vpop.permute.xlu0 %779
      %v782 = vmul.f32 %v644, %v670
      %v783 = vmul.f32 %v645, %v675
      %v784 = vmul.f32 %v646, %v680
      %v785 = vmul.f32 %v647, %v685
      %v786 = vmul.f32 %v648, %v690
      %v787 = vmul.f32 %v649, %v695
      %v788 = vmul.f32 %v650, %v700
      %v789 = vmul.f32 %v651, %v705
      %v790 = vmul.f32 %v652, %v710
      %v791 = vmul.f32 %v653, %v715
      %v792 = vmul.f32 %v654, %v720
      %v793 = vmul.f32 %v655, %v725
      %v794 = vmul.f32 %v656, %v730
      %v795 = vmul.f32 %v657, %v735
      %v796 = vmul.f32 %v658, %v740
      %v797 = vmul.f32 %v659, %v745
      %v798 = vmul.f32 %v660, %v750
      %v799 = vmul.f32 %v661, %v755
      %v800 = vmul.f32 %v662, %v760
      %v801 = vmul.f32 %v663, %v765
      %v802 = vmul.f32 %v664, %v770
      %v803 = vmul.f32 %v665, %v775
      %v804 = vmul.f32 %v666, %v780
      %805 = vst.msk [vmem:[#allocation2] sm:$0xff] %vm475, 0.0
      %806 = vst.msk [vmem:[#allocation2 + $0xbc] sm:$0xff] %vm475, 0.0
      %807 = vst.msk [vmem:[#allocation2 + $0x8] sm:$0xff] %vm475, %v782
      %808 = vst.msk [vmem:[#allocation2 + $0x10] sm:$0xff] %vm475, %v783
      %809 = vst.msk [vmem:[#allocation2 + $0x18] sm:$0xff] %vm475, %v784
      %810 = vst.msk [vmem:[#allocation2 + $0x20] sm:$0xff] %vm475, %v785
      %811 = vst.msk [vmem:[#allocation2 + $0x28] sm:$0xff] %vm475, %v786
      %812 = vst.msk [vmem:[#allocation2 + $0x30] sm:$0xff] %vm475, %v787
      %813 = vst.msk [vmem:[#allocation2 + $0x38] sm:$0xff] %vm475, %v788
      %814 = vst.msk [vmem:[#allocation2 + $0x40] sm:$0xff] %vm475, %v789
      %815 = vst.msk [vmem:[#allocation2 + $0x48] sm:$0xff] %vm475, %v790
      %816 = vst.msk [vmem:[#allocation2 + $0x50] sm:$0xff] %vm475, %v791
      %817 = vst.msk [vmem:[#allocation2 + $0x58] sm:$0xff] %vm475, %v792
      %818 = vst.msk [vmem:[#allocation2 + $0x60] sm:$0xff] %vm475, %v793
      %819 = vst.msk [vmem:[#allocation2 + $0x68] sm:$0xff] %vm475, %v794
      %820 = vst.msk [vmem:[#allocation2 + $0x70] sm:$0xff] %vm475, %v795
      %821 = vst.msk [vmem:[#allocation2 + $0x78] sm:$0xff] %vm475, %v796
      %822 = vst.msk [vmem:[#allocation2 + $0x80] sm:$0xff] %vm475, %v797
      %823 = vst.msk [vmem:[#allocation2 + $0x88] sm:$0xff] %vm475, %v798
      %824 = vst.msk [vmem:[#allocation2 + $0x90] sm:$0xff] %vm475, %v799
      %825 = vst.msk [vmem:[#allocation2 + $0x98] sm:$0xff] %vm475, %v800
      %826 = vst.msk [vmem:[#allocation2 + $0xa0] sm:$0xff] %vm475, %v801
      %827 = vst.msk [vmem:[#allocation2 + $0xa8] sm:$0xff] %vm475, %v802
      %828 = vst.msk [vmem:[#allocation2 + $0xb0] sm:$0xff] %vm475, %v803
      %vm829 = vcmask 27648
      %830 = vst.msk [vmem:[#allocation2 + $0xb8] sm:$0xf] %vm829, %v804
      %v831 = vld [vmem:[#allocation2 + $0x7] sm:$0xff]
      %v832 = vld [vmem:[#allocation2 + $0xf] sm:$0xff]
      %v833 = vld [vmem:[#allocation2 + $0x17] sm:$0xff]
      %v834 = vld [vmem:[#allocation2 + $0x1f] sm:$0xff]
      %v835 = vld [vmem:[#allocation2 + $0x27] sm:$0xff]
      %v836 = vld [vmem:[#allocation2 + $0x2f] sm:$0xff]
      %v837 = vld [vmem:[#allocation2 + $0x37] sm:$0xff]
      %v838 = vld [vmem:[#allocation2 + $0x3f] sm:$0xff]
      %v839 = vld [vmem:[#allocation2 + $0x47] sm:$0xff]
      %v840 = vld [vmem:[#allocation2 + $0x4f] sm:$0xff]
      %v841 = vld [vmem:[#allocation2 + $0x57] sm:$0xff]
      %v842 = vld [vmem:[#allocation2 + $0x5f] sm:$0xff]
      %v843 = vld [vmem:[#allocation2 + $0x67] sm:$0xff]
      %v844 = vld [vmem:[#allocation2 + $0x6f] sm:$0xff]
      %v845 = vld [vmem:[#allocation2 + $0x77] sm:$0xff]
      %v846 = vld [vmem:[#allocation2 + $0x7f] sm:$0xff]
      %v847 = vld [vmem:[#allocation2 + $0x87] sm:$0xff]
      %v848 = vld [vmem:[#allocation2 + $0x8f] sm:$0xff]
      %v849 = vld [vmem:[#allocation2 + $0x8] sm:$0xff]
      %v850 = vld [vmem:[#allocation2 + $0x10] sm:$0xff]
      %v851 = vld [vmem:[#allocation2 + $0x18] sm:$0xff]
      %v852 = vld [vmem:[#allocation2 + $0x20] sm:$0xff]
      %v853 = vld [vmem:[#allocation2 + $0x28] sm:$0xff]
      %v854 = vld [vmem:[#allocation2 + $0x30] sm:$0xff]
      %v855 = vld [vmem:[#allocation2 + $0x38] sm:$0xff]
      %v856 = vld [vmem:[#allocation2 + $0x40] sm:$0xff]
      %v857 = vld [vmem:[#allocation2 + $0x48] sm:$0xff]
      %v858 = vld [vmem:[#allocation2 + $0x50] sm:$0xff]
      %v859 = vld [vmem:[#allocation2 + $0x58] sm:$0xff]
      %v860 = vld [vmem:[#allocation2 + $0x60] sm:$0xff]
      %v861 = vld [vmem:[#allocation2 + $0x68] sm:$0xff]
      %v862 = vld [vmem:[#allocation2 + $0x70] sm:$0xff]
      %v863 = vld [vmem:[#allocation2 + $0x78] sm:$0xff]
      %v864 = vld [vmem:[#allocation2 + $0x80] sm:$0xff]
      %v865 = vld [vmem:[#allocation2 + $0x88] sm:$0xff]
      %v866 = vld [vmem:[#allocation2 + $0x90] sm:$0xff]
      %v867 = vld [vmem:[#allocation2 + $0x9] sm:$0xff]
      %v868 = vld [vmem:[#allocation2 + $0x11] sm:$0xff]
      %v869 = vld [vmem:[#allocation2 + $0x19] sm:$0xff]
      %v870 = vld [vmem:[#allocation2 + $0x21] sm:$0xff]
      %v871 = vld [vmem:[#allocation2 + $0x29] sm:$0xff]
      %v872 = vld [vmem:[#allocation2 + $0x31] sm:$0xff]
      %v873 = vld [vmem:[#allocation2 + $0x39] sm:$0xff]
      %v874 = vld [vmem:[#allocation2 + $0x41] sm:$0xff]
      %v875 = vld [vmem:[#allocation2 + $0x49] sm:$0xff]
      %v876 = vld [vmem:[#allocation2 + $0x51] sm:$0xff]
      %v877 = vld [vmem:[#allocation2 + $0x59] sm:$0xff]
      %v878 = vld [vmem:[#allocation2 + $0x61] sm:$0xff]
      %v879 = vld [vmem:[#allocation2 + $0x69] sm:$0xff]
      %v880 = vld [vmem:[#allocation2 + $0x71] sm:$0xff]
      %v881 = vld [vmem:[#allocation2 + $0x79] sm:$0xff]
      %v882 = vld [vmem:[#allocation2 + $0x81] sm:$0xff]
      %v883 = vld [vmem:[#allocation2 + $0x89] sm:$0xff]
      %v884 = vld [vmem:[#allocation2 + $0x91] sm:$0xff]
      %v885 = vld [vmem:[#allocation2 + $0x99] sm:$0xff]
      %v886 = vld [vmem:[#allocation2 + $0xa1] sm:$0xff]
      %v887 = vld [vmem:[#allocation2 + $0x1a] sm:$0xff]
      %v888 = vld [vmem:[#allocation2 + $0x22] sm:$0xff]
      %v889 = vld [vmem:[#allocation2 + $0x2a] sm:$0xff]
      %v890 = vld [vmem:[#allocation2 + $0x32] sm:$0xff]
      %v891 = vld [vmem:[#allocation2 + $0x3a] sm:$0xff]
      %v892 = vld [vmem:[#allocation2 + $0x42] sm:$0xff]
      %v893 = vld [vmem:[#allocation2 + $0x4a] sm:$0xff]
      %v894 = vld [vmem:[#allocation2 + $0x52] sm:$0xff]
      %v895 = vld [vmem:[#allocation2 + $0x5a] sm:$0xff]
      %v896 = vld [vmem:[#allocation2 + $0x62] sm:$0xff]
      %v897 = vld [vmem:[#allocation2 + $0x6a] sm:$0xff]
      %v898 = vld [vmem:[#allocation2 + $0x72] sm:$0xff]
      %v899 = vld [vmem:[#allocation2 + $0x7a] sm:$0xff]
      %v900 = vld [vmem:[#allocation2 + $0x82] sm:$0xff]
      %v901 = vld [vmem:[#allocation2 + $0x8a] sm:$0xff]
      %v902 = vld [vmem:[#allocation2 + $0x92] sm:$0xff]
      %v903 = vld [vmem:[#allocation2 + $0x9a] sm:$0xff]
      %v904 = vld [vmem:[#allocation2 + $0xa2] sm:$0xff]
      %v905 = vld [vmem:[#allocation2 + $0x1b] sm:$0xff]
      %v906 = vld [vmem:[#allocation2 + $0x23] sm:$0xff]
      %v907 = vld [vmem:[#allocation2 + $0x2b] sm:$0xff]
      %v908 = vld [vmem:[#allocation2 + $0x33] sm:$0xff]
      %v909 = vld [vmem:[#allocation2 + $0x3b] sm:$0xff]
      %v910 = vld [vmem:[#allocation2 + $0x43] sm:$0xff]
      %v911 = vld [vmem:[#allocation2 + $0x4b] sm:$0xff]
      %v912 = vld [vmem:[#allocation2 + $0x53] sm:$0xff]
      %v913 = vld [vmem:[#allocation2 + $0x5b] sm:$0xff]
      %v914 = vld [vmem:[#allocation2 + $0x63] sm:$0xff]
      %v915 = vld [vmem:[#allocation2 + $0x6b] sm:$0xff]
      %v916 = vld [vmem:[#allocation2 + $0x73] sm:$0xff]
      %v917 = vld [vmem:[#allocation2 + $0x7b] sm:$0xff]
      %v918 = vld [vmem:[#allocation2 + $0x83] sm:$0xff]
      %v919 = vld [vmem:[#allocation2 + $0x8b] sm:$0xff]
      %v920 = vld [vmem:[#allocation2 + $0x93] sm:$0xff]
      %v921 = vld [vmem:[#allocation2 + $0x9b] sm:$0xff]
      %v922 = vld [vmem:[#allocation2 + $0xa3] sm:$0xff]
      %v923 = vld [vmem:[#allocation2 + $0xab] sm:$0xff]
      %v924 = vld [vmem:[#allocation2 + $0xb3] sm:$0xff]
      %v925 = vld [vmem:[#allocation2 + $0x2c] sm:$0xff]
      %v926 = vld [vmem:[#allocation2 + $0x34] sm:$0xff]
      %v927 = vld [vmem:[#allocation2 + $0x3c] sm:$0xff]
      %v928 = vld [vmem:[#allocation2 + $0x44] sm:$0xff]
      %v929 = vld [vmem:[#allocation2 + $0x4c] sm:$0xff]
      %v930 = vld [vmem:[#allocation2 + $0x54] sm:$0xff]
      %v931 = vld [vmem:[#allocation2 + $0x5c] sm:$0xff]
      %v932 = vld [vmem:[#allocation2 + $0x64] sm:$0xff]
      %v933 = vld [vmem:[#allocation2 + $0x6c] sm:$0xff]
      %v934 = vld [vmem:[#allocation2 + $0x74] sm:$0xff]
      %v935 = vld [vmem:[#allocation2 + $0x7c] sm:$0xff]
      %v936 = vld [vmem:[#allocation2 + $0x84] sm:$0xff]
      %v937 = vld [vmem:[#allocation2 + $0x8c] sm:$0xff]
      %v938 = vld [vmem:[#allocation2 + $0x94] sm:$0xff]
      %v939 = vld [vmem:[#allocation2 + $0x9c] sm:$0xff]
      %v940 = vld [vmem:[#allocation2 + $0xa4] sm:$0xff]
      %v941 = vld [vmem:[#allocation2 + $0xac] sm:$0xff]
      %v942 = vld [vmem:[#allocation2 + $0xb4] sm:$0xff]
      %v943 = vld [vmem:[#allocation2 + $0x2d] sm:$0xff]
      %v944 = vld [vmem:[#allocation2 + $0x35] sm:$0xff]
      %v945 = vld [vmem:[#allocation2 + $0x3d] sm:$0xff]
      %v946 = vld [vmem:[#allocation2 + $0x45] sm:$0xff]
      %v947 = vld [vmem:[#allocation2 + $0x4d] sm:$0xff]
      %v948 = vld [vmem:[#allocation2 + $0x55] sm:$0xff]
      %v949 = vld [vmem:[#allocation2 + $0x5d] sm:$0xff]
      %v950 = vld [vmem:[#allocation2 + $0x65] sm:$0xff]
      %v951 = vld [vmem:[#allocation2 + $0x6d] sm:$0xff]
      %v952 = vld [vmem:[#allocation2 + $0x75] sm:$0xff]
      %v953 = vld [vmem:[#allocation2 + $0x7d] sm:$0xff]
      %v954 = vld [vmem:[#allocation2 + $0x85] sm:$0xff]
      %v955 = vld [vmem:[#allocation2 + $0x8d] sm:$0xff]
      %v956 = vld [vmem:[#allocation2 + $0x95] sm:$0xff]
      %v957 = vld [vmem:[#allocation2 + $0x9d] sm:$0xff]
      %v958 = vld [vmem:[#allocation2 + $0xa5] sm:$0xff]
      %v959 = vld [vmem:[#allocation2 + $0xad] sm:$0xff]
      %v960 = vld [vmem:[#allocation2 + $0xb5] sm:$0xff]
      %979 = vrot.lane.b32.xlu0 %v849, 4
      %v980 = vpop.permute.xlu0 %979
      %981 = vrot.lane.b32.xlu0 %v850, 4
      %v982 = vpop.permute.xlu0 %981
      %983 = vrot.lane.b32.xlu0 %v851, 4
      %v984 = vpop.permute.xlu0 %983
      %985 = vrot.lane.b32.xlu0 %v852, 4
      %v986 = vpop.permute.xlu0 %985
      %987 = vrot.lane.b32.xlu0 %v853, 4
      %v988 = vpop.permute.xlu0 %987
      %989 = vrot.lane.b32.xlu0 %v854, 4
      %v990 = vpop.permute.xlu0 %989
      %991 = vrot.lane.b32.xlu0 %v855, 4
      %v992 = vpop.permute.xlu0 %991
      %993 = vrot.lane.b32.xlu0 %v856, 4
      %v994 = vpop.permute.xlu0 %993
      %995 = vrot.lane.b32.xlu0 %v857, 4
      %v996 = vpop.permute.xlu0 %995
      %997 = vrot.lane.b32.xlu0 %v858, 4
      %v998 = vpop.permute.xlu0 %997
      %999 = vrot.lane.b32.xlu0 %v859, 4
      %v1000 = vpop.permute.xlu0 %999
      %1001 = vrot.lane.b32.xlu0 %v860, 4
      %v1002 = vpop.permute.xlu0 %1001
      %1003 = vrot.lane.b32.xlu0 %v861, 4
      %v1004 = vpop.permute.xlu0 %1003
      %1005 = vrot.lane.b32.xlu0 %v862, 4
      %v1006 = vpop.permute.xlu0 %1005
      %1007 = vrot.lane.b32.xlu0 %v863, 4
      %v1008 = vpop.permute.xlu0 %1007
      %1009 = vrot.lane.b32.xlu0 %v864, 4
      %v1010 = vpop.permute.xlu0 %1009
      %1011 = vrot.lane.b32.xlu0 %v865, 4
      %v1012 = vpop.permute.xlu0 %1011
      %1013 = vrot.lane.b32.xlu0 %v866, 4
      %v1014 = vpop.permute.xlu0 %1013
      %1051 = vrot.lane.b32.xlu0 %v867, 8
      %v1052 = vpop.permute.xlu0 %1051
      %1053 = vrot.lane.b32.xlu0 %v868, 8
      %v1054 = vpop.permute.xlu0 %1053
      %1055 = vrot.lane.b32.xlu0 %v869, 8
      %v1056 = vpop.permute.xlu0 %1055
      %1057 = vrot.lane.b32.xlu0 %v870, 8
      %v1058 = vpop.permute.xlu0 %1057
      %1059 = vrot.lane.b32.xlu0 %v871, 8
      %v1060 = vpop.permute.xlu0 %1059
      %1061 = vrot.lane.b32.xlu0 %v872, 8
      %v1062 = vpop.permute.xlu0 %1061
      %1063 = vrot.lane.b32.xlu0 %v873, 8
      %v1064 = vpop.permute.xlu0 %1063
      %1065 = vrot.lane.b32.xlu0 %v874, 8
      %v1066 = vpop.permute.xlu0 %1065
      %1067 = vrot.lane.b32.xlu0 %v875, 8
      %v1068 = vpop.permute.xlu0 %1067
      %1069 = vrot.lane.b32.xlu0 %v876, 8
      %v1070 = vpop.permute.xlu0 %1069
      %1071 = vrot.lane.b32.xlu0 %v877, 8
      %v1072 = vpop.permute.xlu0 %1071
      %1073 = vrot.lane.b32.xlu0 %v878, 8
      %v1074 = vpop.permute.xlu0 %1073
      %1075 = vrot.lane.b32.xlu0 %v879, 8
      %v1076 = vpop.permute.xlu0 %1075
      %1077 = vrot.lane.b32.xlu0 %v880, 8
      %v1078 = vpop.permute.xlu0 %1077
      %1079 = vrot.lane.b32.xlu0 %v881, 8
      %v1080 = vpop.permute.xlu0 %1079
      %1081 = vrot.lane.b32.xlu0 %v882, 8
      %v1082 = vpop.permute.xlu0 %1081
      %1083 = vrot.lane.b32.xlu0 %v883, 8
      %v1084 = vpop.permute.xlu0 %1083
      %1085 = vrot.lane.b32.xlu0 %v884, 8
      %v1086 = vpop.permute.xlu0 %1085
      %1107 = vrot.lane.b32.xlu0 %v869, 12
      %v1108 = vpop.permute.xlu0 %1107
      %1109 = vrot.lane.b32.xlu0 %v870, 12
      %v1110 = vpop.permute.xlu0 %1109
      %1111 = vrot.lane.b32.xlu0 %v871, 12
      %v1112 = vpop.permute.xlu0 %1111
      %1113 = vrot.lane.b32.xlu0 %v872, 12
      %v1114 = vpop.permute.xlu0 %1113
      %1115 = vrot.lane.b32.xlu0 %v873, 12
      %v1116 = vpop.permute.xlu0 %1115
      %1117 = vrot.lane.b32.xlu0 %v874, 12
      %v1118 = vpop.permute.xlu0 %1117
      %1119 = vrot.lane.b32.xlu0 %v875, 12
      %v1120 = vpop.permute.xlu0 %1119
      %1121 = vrot.lane.b32.xlu0 %v876, 12
      %v1122 = vpop.permute.xlu0 %1121
      %1123 = vrot.lane.b32.xlu0 %v877, 12
      %v1124 = vpop.permute.xlu0 %1123
      %1125 = vrot.lane.b32.xlu0 %v878, 12
      %v1126 = vpop.permute.xlu0 %1125
      %1127 = vrot.lane.b32.xlu0 %v879, 12
      %v1128 = vpop.permute.xlu0 %1127
      %1129 = vrot.lane.b32.xlu0 %v880, 12
      %v1130 = vpop.permute.xlu0 %1129
      %1131 = vrot.lane.b32.xlu0 %v881, 12
      %v1132 = vpop.permute.xlu0 %1131
      %1133 = vrot.lane.b32.xlu0 %v882, 12
      %v1134 = vpop.permute.xlu0 %1133
      %1135 = vrot.lane.b32.xlu0 %v883, 12
      %v1136 = vpop.permute.xlu0 %1135
      %1137 = vrot.lane.b32.xlu0 %v884, 12
      %v1138 = vpop.permute.xlu0 %1137
      %1139 = vrot.lane.b32.xlu0 %v885, 12
      %v1140 = vpop.permute.xlu0 %1139
      %1141 = vrot.lane.b32.xlu0 %v886, 12
      %v1142 = vpop.permute.xlu0 %1141
      %1179 = vrot.lane.b32.xlu0 %v887, 16
      %v1180 = vpop.permute.xlu0 %1179
      %1181 = vrot.lane.b32.xlu0 %v888, 16
      %v1182 = vpop.permute.xlu0 %1181
      %1183 = vrot.lane.b32.xlu0 %v889, 16
      %v1184 = vpop.permute.xlu0 %1183
      %1185 = vrot.lane.b32.xlu0 %v890, 16
      %v1186 = vpop.permute.xlu0 %1185
      %1187 = vrot.lane.b32.xlu0 %v891, 16
      %v1188 = vpop.permute.xlu0 %1187
      %1189 = vrot.lane.b32.xlu0 %v892, 16
      %v1190 = vpop.permute.xlu0 %1189
      %1191 = vrot.lane.b32.xlu0 %v893, 16
      %v1192 = vpop.permute.xlu0 %1191
      %1193 = vrot.lane.b32.xlu0 %v894, 16
      %v1194 = vpop.permute.xlu0 %1193
      %1195 = vrot.lane.b32.xlu0 %v895, 16
      %v1196 = vpop.permute.xlu0 %1195
      %1197 = vrot.lane.b32.xlu0 %v896, 16
      %v1198 = vpop.permute.xlu0 %1197
      %1199 = vrot.lane.b32.xlu0 %v897, 16
      %v1200 = vpop.permute.xlu0 %1199
      %1201 = vrot.lane.b32.xlu0 %v898, 16
      %v1202 = vpop.permute.xlu0 %1201
      %1203 = vrot.lane.b32.xlu0 %v899, 16
      %v1204 = vpop.permute.xlu0 %1203
      %1205 = vrot.lane.b32.xlu0 %v900, 16
      %v1206 = vpop.permute.xlu0 %1205
      %1207 = vrot.lane.b32.xlu0 %v901, 16
      %v1208 = vpop.permute.xlu0 %1207
      %1209 = vrot.lane.b32.xlu0 %v902, 16
      %v1210 = vpop.permute.xlu0 %1209
      %1211 = vrot.lane.b32.xlu0 %v903, 16
      %v1212 = vpop.permute.xlu0 %1211
      %1213 = vrot.lane.b32.xlu0 %v904, 16
      %v1214 = vpop.permute.xlu0 %1213
      %1251 = vrot.lane.b32.xlu0 %v905, 20
      %v1252 = vpop.permute.xlu0 %1251
      %1253 = vrot.lane.b32.xlu0 %v906, 20
      %v1254 = vpop.permute.xlu0 %1253
      %1255 = vrot.lane.b32.xlu0 %v907, 20
      %v1256 = vpop.permute.xlu0 %1255
      %1257 = vrot.lane.b32.xlu0 %v908, 20
      %v1258 = vpop.permute.xlu0 %1257
      %1259 = vrot.lane.b32.xlu0 %v909, 20
      %v1260 = vpop.permute.xlu0 %1259
      %1261 = vrot.lane.b32.xlu0 %v910, 20
      %v1262 = vpop.permute.xlu0 %1261
      %1263 = vrot.lane.b32.xlu0 %v911, 20
      %v1264 = vpop.permute.xlu0 %1263
      %1265 = vrot.lane.b32.xlu0 %v912, 20
      %v1266 = vpop.permute.xlu0 %1265
      %1267 = vrot.lane.b32.xlu0 %v913, 20
      %v1268 = vpop.permute.xlu0 %1267
      %1269 = vrot.lane.b32.xlu0 %v914, 20
      %v1270 = vpop.permute.xlu0 %1269
      %1271 = vrot.lane.b32.xlu0 %v915, 20
      %v1272 = vpop.permute.xlu0 %1271
      %1273 = vrot.lane.b32.xlu0 %v916, 20
      %v1274 = vpop.permute.xlu0 %1273
      %1275 = vrot.lane.b32.xlu0 %v917, 20
      %v1276 = vpop.permute.xlu0 %1275
      %1277 = vrot.lane.b32.xlu0 %v918, 20
      %v1278 = vpop.permute.xlu0 %1277
      %1279 = vrot.lane.b32.xlu0 %v919, 20
      %v1280 = vpop.permute.xlu0 %1279
      %1281 = vrot.lane.b32.xlu0 %v920, 20
      %v1282 = vpop.permute.xlu0 %1281
      %1283 = vrot.lane.b32.xlu0 %v921, 20
      %v1284 = vpop.permute.xlu0 %1283
      %1285 = vrot.lane.b32.xlu0 %v922, 20
      %v1286 = vpop.permute.xlu0 %1285
      %1307 = vrot.lane.b32.xlu0 %v907, 24
      %v1308 = vpop.permute.xlu0 %1307
      %1309 = vrot.lane.b32.xlu0 %v908, 24
      %v1310 = vpop.permute.xlu0 %1309
      %1311 = vrot.lane.b32.xlu0 %v909, 24
      %v1312 = vpop.permute.xlu0 %1311
      %1313 = vrot.lane.b32.xlu0 %v910, 24
      %v1314 = vpop.permute.xlu0 %1313
      %1315 = vrot.lane.b32.xlu0 %v911, 24
      %v1316 = vpop.permute.xlu0 %1315
      %1317 = vrot.lane.b32.xlu0 %v912, 24
      %v1318 = vpop.permute.xlu0 %1317
      %1319 = vrot.lane.b32.xlu0 %v913, 24
      %v1320 = vpop.permute.xlu0 %1319
      %1321 = vrot.lane.b32.xlu0 %v914, 24
      %v1322 = vpop.permute.xlu0 %1321
      %1323 = vrot.lane.b32.xlu0 %v915, 24
      %v1324 = vpop.permute.xlu0 %1323
      %1325 = vrot.lane.b32.xlu0 %v916, 24
      %v1326 = vpop.permute.xlu0 %1325
      %1327 = vrot.lane.b32.xlu0 %v917, 24
      %v1328 = vpop.permute.xlu0 %1327
      %1329 = vrot.lane.b32.xlu0 %v918, 24
      %v1330 = vpop.permute.xlu0 %1329
      %1331 = vrot.lane.b32.xlu0 %v919, 24
      %v1332 = vpop.permute.xlu0 %1331
      %1333 = vrot.lane.b32.xlu0 %v920, 24
      %v1334 = vpop.permute.xlu0 %1333
      %1335 = vrot.lane.b32.xlu0 %v921, 24
      %v1336 = vpop.permute.xlu0 %1335
      %1337 = vrot.lane.b32.xlu0 %v922, 24
      %v1338 = vpop.permute.xlu0 %1337
      %1339 = vrot.lane.b32.xlu0 %v923, 24
      %v1340 = vpop.permute.xlu0 %1339
      %1341 = vrot.lane.b32.xlu0 %v924, 24
      %v1342 = vpop.permute.xlu0 %1341
      %1379 = vrot.lane.b32.xlu0 %v925, 28
      %v1380 = vpop.permute.xlu0 %1379
      %1381 = vrot.lane.b32.xlu0 %v926, 28
      %v1382 = vpop.permute.xlu0 %1381
      %1383 = vrot.lane.b32.xlu0 %v927, 28
      %v1384 = vpop.permute.xlu0 %1383
      %1385 = vrot.lane.b32.xlu0 %v928, 28
      %v1386 = vpop.permute.xlu0 %1385
      %1387 = vrot.lane.b32.xlu0 %v929, 28
      %v1388 = vpop.permute.xlu0 %1387
      %1389 = vrot.lane.b32.xlu0 %v930, 28
      %v1390 = vpop.permute.xlu0 %1389
      %1391 = vrot.lane.b32.xlu0 %v931, 28
      %v1392 = vpop.permute.xlu0 %1391
      %1393 = vrot.lane.b32.xlu0 %v932, 28
      %v1394 = vpop.permute.xlu0 %1393
      %1395 = vrot.lane.b32.xlu0 %v933, 28
      %v1396 = vpop.permute.xlu0 %1395
      %1397 = vrot.lane.b32.xlu0 %v934, 28
      %v1398 = vpop.permute.xlu0 %1397
      %1399 = vrot.lane.b32.xlu0 %v935, 28
      %v1400 = vpop.permute.xlu0 %1399
      %1401 = vrot.lane.b32.xlu0 %v936, 28
      %v1402 = vpop.permute.xlu0 %1401
      %1403 = vrot.lane.b32.xlu0 %v937, 28
      %v1404 = vpop.permute.xlu0 %1403
      %1405 = vrot.lane.b32.xlu0 %v938, 28
      %v1406 = vpop.permute.xlu0 %1405
      %1407 = vrot.lane.b32.xlu0 %v939, 28
      %v1408 = vpop.permute.xlu0 %1407
      %1409 = vrot.lane.b32.xlu0 %v940, 28
      %v1410 = vpop.permute.xlu0 %1409
      %1411 = vrot.lane.b32.xlu0 %v941, 28
      %v1412 = vpop.permute.xlu0 %1411
      %1413 = vrot.lane.b32.xlu0 %v942, 28
      %v1414 = vpop.permute.xlu0 %1413
      %1451 = vrot.lane.b32.xlu0 %v943, 32
      %v1452 = vpop.permute.xlu0 %1451
      %1453 = vrot.lane.b32.xlu0 %v944, 32
      %v1454 = vpop.permute.xlu0 %1453
      %1455 = vrot.lane.b32.xlu0 %v945, 32
      %v1456 = vpop.permute.xlu0 %1455
      %1457 = vrot.lane.b32.xlu0 %v946, 32
      %v1458 = vpop.permute.xlu0 %1457
      %1459 = vrot.lane.b32.xlu0 %v947, 32
      %v1460 = vpop.permute.xlu0 %1459
      %1461 = vrot.lane.b32.xlu0 %v948, 32
      %v1462 = vpop.permute.xlu0 %1461
      %1463 = vrot.lane.b32.xlu0 %v949, 32
      %v1464 = vpop.permute.xlu0 %1463
      %1465 = vrot.lane.b32.xlu0 %v950, 32
      %v1466 = vpop.permute.xlu0 %1465
      %1467 = vrot.lane.b32.xlu0 %v951, 32
      %v1468 = vpop.permute.xlu0 %1467
      %1469 = vrot.lane.b32.xlu0 %v952, 32
      %v1470 = vpop.permute.xlu0 %1469
      %1471 = vrot.lane.b32.xlu0 %v953, 32
      %v1472 = vpop.permute.xlu0 %1471
      %1473 = vrot.lane.b32.xlu0 %v954, 32
      %v1474 = vpop.permute.xlu0 %1473
      %1475 = vrot.lane.b32.xlu0 %v955, 32
      %v1476 = vpop.permute.xlu0 %1475
      %1477 = vrot.lane.b32.xlu0 %v956, 32
      %v1478 = vpop.permute.xlu0 %1477
      %1479 = vrot.lane.b32.xlu0 %v957, 32
      %v1480 = vpop.permute.xlu0 %1479
      %1481 = vrot.lane.b32.xlu0 %v958, 32
      %v1482 = vpop.permute.xlu0 %1481
      %1483 = vrot.lane.b32.xlu0 %v959, 32
      %v1484 = vpop.permute.xlu0 %1483
      %1485 = vrot.lane.b32.xlu0 %v960, 32
      %v1486 = vpop.permute.xlu0 %1485
      %v1505 = vsel %vm475, %v831, %v980
      %v1506 = vsel %vm475, %v832, %v982
      %v1507 = vsel %vm475, %v833, %v984
      %v1508 = vsel %vm475, %v834, %v986
      %v1509 = vsel %vm475, %v835, %v988
      %v1510 = vsel %vm475, %v836, %v990
      %v1511 = vsel %vm475, %v837, %v992
      %v1512 = vsel %vm475, %v838, %v994
      %v1513 = vsel %vm475, %v839, %v996
      %v1514 = vsel %vm475, %v840, %v998
      %v1515 = vsel %vm475, %v841, %v1000
      %v1516 = vsel %vm475, %v842, %v1002
      %v1517 = vsel %vm475, %v843, %v1004
      %v1518 = vsel %vm475, %v844, %v1006
      %v1519 = vsel %vm475, %v845, %v1008
      %v1520 = vsel %vm475, %v846, %v1010
      %v1521 = vsel %vm475, %v847, %v1012
      %v1522 = vsel %vm475, %v848, %v1014
      %vm1523 = vcmask 64512
      %v1524 = vsel %vm1523, %v1505, %v1052
      %v1525 = vsel %vm1523, %v1506, %v1054
      %v1526 = vsel %vm1523, %v1507, %v1056
      %v1527 = vsel %vm1523, %v1508, %v1058
      %v1528 = vsel %vm1523, %v1509, %v1060
      %v1529 = vsel %vm1523, %v1510, %v1062
      %v1530 = vsel %vm1523, %v1511, %v1064
      %v1531 = vsel %vm1523, %v1512, %v1066
      %v1532 = vsel %vm1523, %v1513, %v1068
      %v1533 = vsel %vm1523, %v1514, %v1070
      %v1534 = vsel %vm1523, %v1515, %v1072
      %v1535 = vsel %vm1523, %v1516, %v1074
      %v1536 = vsel %vm1523, %v1517, %v1076
      %v1537 = vsel %vm1523, %v1518, %v1078
      %v1538 = vsel %vm1523, %v1519, %v1080
      %v1539 = vsel %vm1523, %v1520, %v1082
      %v1540 = vsel %vm1523, %v1521, %v1084
      %v1541 = vsel %vm1523, %v1522, %v1086
      %vm1542 = vcmask 97280
      %v1543 = vsel %vm1542, %v1524, %v1108
      %v1544 = vsel %vm1542, %v1525, %v1110
      %v1545 = vsel %vm1542, %v1526, %v1112
      %v1546 = vsel %vm1542, %v1527, %v1114
      %v1547 = vsel %vm1542, %v1528, %v1116
      %v1548 = vsel %vm1542, %v1529, %v1118
      %v1549 = vsel %vm1542, %v1530, %v1120
      %v1550 = vsel %vm1542, %v1531, %v1122
      %v1551 = vsel %vm1542, %v1532, %v1124
      %v1552 = vsel %vm1542, %v1533, %v1126
      %v1553 = vsel %vm1542, %v1534, %v1128
      %v1554 = vsel %vm1542, %v1535, %v1130
      %v1555 = vsel %vm1542, %v1536, %v1132
      %v1556 = vsel %vm1542, %v1537, %v1134
      %v1557 = vsel %vm1542, %v1538, %v1136
      %v1558 = vsel %vm1542, %v1539, %v1138
      %v1559 = vsel %vm1542, %v1540, %v1140
      %v1560 = vsel %vm1542, %v1541, %v1142
      %vm1561 = vcmask 130048
      %v1562 = vsel %vm1561, %v1543, %v1180
      %v1563 = vsel %vm1561, %v1544, %v1182
      %v1564 = vsel %vm1561, %v1545, %v1184
      %v1565 = vsel %vm1561, %v1546, %v1186
      %v1566 = vsel %vm1561, %v1547, %v1188
      %v1567 = vsel %vm1561, %v1548, %v1190
      %v1568 = vsel %vm1561, %v1549, %v1192
      %v1569 = vsel %vm1561, %v1550, %v1194
      %v1570 = vsel %vm1561, %v1551, %v1196
      %v1571 = vsel %vm1561, %v1552, %v1198
      %v1572 = vsel %vm1561, %v1553, %v1200
      %v1573 = vsel %vm1561, %v1554, %v1202
      %v1574 = vsel %vm1561, %v1555, %v1204
      %v1575 = vsel %vm1561, %v1556, %v1206
      %v1576 = vsel %vm1561, %v1557, %v1208
      %v1577 = vsel %vm1561, %v1558, %v1210
      %v1578 = vsel %vm1561, %v1559, %v1212
      %v1579 = vsel %vm1561, %v1560, %v1214
      %vm1580 = vcmask 162816
      %v1581 = vsel %vm1580, %v1562, %v1252
      %v1582 = vsel %vm1580, %v1563, %v1254
      %v1583 = vsel %vm1580, %v1564, %v1256
      %v1584 = vsel %vm1580, %v1565, %v1258
      %v1585 = vsel %vm1580, %v1566, %v1260
      %v1586 = vsel %vm1580, %v1567, %v1262
      %v1587 = vsel %vm1580, %v1568, %v1264
      %v1588 = vsel %vm1580, %v1569, %v1266
      %v1589 = vsel %vm1580, %v1570, %v1268
      %v1590 = vsel %vm1580, %v1571, %v1270
      %v1591 = vsel %vm1580, %v1572, %v1272
      %v1592 = vsel %vm1580, %v1573, %v1274
      %v1593 = vsel %vm1580, %v1574, %v1276
      %v1594 = vsel %vm1580, %v1575, %v1278
      %v1595 = vsel %vm1580, %v1576, %v1280
      %v1596 = vsel %vm1580, %v1577, %v1282
      %v1597 = vsel %vm1580, %v1578, %v1284
      %v1598 = vsel %vm1580, %v1579, %v1286
      %vm1599 = vcmask 195584
      %v1600 = vsel %vm1599, %v1581, %v1308
      %v1601 = vsel %vm1599, %v1582, %v1310
      %v1602 = vsel %vm1599, %v1583, %v1312
      %v1603 = vsel %vm1599, %v1584, %v1314
      %v1604 = vsel %vm1599, %v1585, %v1316
      %v1605 = vsel %vm1599, %v1586, %v1318
      %v1606 = vsel %vm1599, %v1587, %v1320
      %v1607 = vsel %vm1599, %v1588, %v1322
      %v1608 = vsel %vm1599, %v1589, %v1324
      %v1609 = vsel %vm1599, %v1590, %v1326
      %v1610 = vsel %vm1599, %v1591, %v1328
      %v1611 = vsel %vm1599, %v1592, %v1330
      %v1612 = vsel %vm1599, %v1593, %v1332
      %v1613 = vsel %vm1599, %v1594, %v1334
      %v1614 = vsel %vm1599, %v1595, %v1336
      %v1615 = vsel %vm1599, %v1596, %v1338
      %v1616 = vsel %vm1599, %v1597, %v1340
      %v1617 = vsel %vm1599, %v1598, %v1342
      %vm1618 = vcmask 228352
      %v1619 = vsel %vm1618, %v1600, %v1380
      %v1620 = vsel %vm1618, %v1601, %v1382
      %v1621 = vsel %vm1618, %v1602, %v1384
      %v1622 = vsel %vm1618, %v1603, %v1386
      %v1623 = vsel %vm1618, %v1604, %v1388
      %v1624 = vsel %vm1618, %v1605, %v1390
      %v1625 = vsel %vm1618, %v1606, %v1392
      %v1626 = vsel %vm1618, %v1607, %v1394
      %v1627 = vsel %vm1618, %v1608, %v1396
      %v1628 = vsel %vm1618, %v1609, %v1398
      %v1629 = vsel %vm1618, %v1610, %v1400
      %v1630 = vsel %vm1618, %v1611, %v1402
      %v1631 = vsel %vm1618, %v1612, %v1404
      %v1632 = vsel %vm1618, %v1613, %v1406
      %v1633 = vsel %vm1618, %v1614, %v1408
      %v1634 = vsel %vm1618, %v1615, %v1410
      %v1635 = vsel %vm1618, %v1616, %v1412
      %v1636 = vsel %vm1618, %v1617, %v1414
      %vm1637 = vcmask 261120
      %v1638 = vsel %vm1637, %v1619, %v1452
      %v1639 = vsel %vm1637, %v1620, %v1454
      %v1640 = vsel %vm1637, %v1621, %v1456
      %v1641 = vsel %vm1637, %v1622, %v1458
      %v1642 = vsel %vm1637, %v1623, %v1460
      %v1643 = vsel %vm1637, %v1624, %v1462
      %v1644 = vsel %vm1637, %v1625, %v1464
      %v1645 = vsel %vm1637, %v1626, %v1466
      %v1646 = vsel %vm1637, %v1627, %v1468
      %v1647 = vsel %vm1637, %v1628, %v1470
      %v1648 = vsel %vm1637, %v1629, %v1472
      %v1649 = vsel %vm1637, %v1630, %v1474
      %v1650 = vsel %vm1637, %v1631, %v1476
      %v1651 = vsel %vm1637, %v1632, %v1478
      %v1652 = vsel %vm1637, %v1633, %v1480
      %v1653 = vsel %vm1637, %v1634, %v1482
      %v1654 = vsel %vm1637, %v1635, %v1484
      %v1655 = vsel %vm1637, %v1636, %v1486
      %v1656 = vpack.c.bf16 %v1639, %v1638
      %v1657 = vpack.c.bf16 %v1641, %v1640
      %v1658 = vpack.c.bf16 %v1643, %v1642
      %v1659 = vpack.c.bf16 %v1645, %v1644
      %v1660 = vpack.c.bf16 %v1647, %v1646
      %v1661 = vpack.c.bf16 %v1649, %v1648
      %v1662 = vpack.c.bf16 %v1651, %v1650
      %v1663 = vpack.c.bf16 %v1653, %v1652
      %v1664 = vpack.c.bf16 %v1655, %v1654
      %v1665 = vld [vmem:[%s4] sm:$0xf]
      %v1666 = vld [vmem:[%s4 + $0x4] sm:$0xf]
      %v1667 = vld [vmem:[%s4 + $0x8] sm:$0xf]
      %v1668 = vld [vmem:[%s4 + $0xc] sm:$0xf]
      %v1669 = vld [vmem:[%s4 + $0x10] sm:$0x3]
      %v1670 = vld [vmem:[%s5] sm:$0x1]
      %v1672 = vlaneseq
      %v1673 = vshrl.u32 %v1672, 7
      %v1674 = vsub.s32 0, %v1673
      %v1675 = vrot.slane %v1670, %v1674
      %v1682 = vunpack.c.l.b16 %v1665
      %v1683 = vunpack.c.l.b16 %v1666
      %v1684 = vunpack.c.l.b16 %v1667
      %v1685 = vunpack.c.l.b16 %v1668
      %v1686 = vunpack.c.l.b16 %v1669
      %v1687 = vpack.c.b16 %v1683, %v1682
      %v1688 = vpack.c.b16 %v1685, %v1684
      %v1689 = vpack.c.b16 %v1686, %v1686
      %vm1692 = vcmask 293888
      %v1694 = vsel %vm1692, %v1656, 0
      %v1697 = vsel %vm1692, %v1657, 0
      %v1700 = vsel %vm1692, %v1658, 0
      %v1703 = vsel %vm1692, %v1659, 0
      %v1706 = vsel %vm1692, %v1660, 0
      %v1709 = vsel %vm1692, %v1661, 0
      %v1712 = vsel %vm1692, %v1662, 0
      %v1715 = vsel %vm1692, %v1663, 0
      %v1718 = vsel %vm1692, %v1664, 0
      %v1721 = vsel %vm512, %v1689, 0
      %1723 = vmatprep.subr.bf16.mxu0 0
      %1724 = vmatpush1.bf16.msra.mxu0 %v1687
      %1725 = vmatprep.subr.bf16.mxu0 0
      %1726 = vmatpush1.bf16.msra.mxu0 %v1688
      %1727 = vmatprep.subr.bf16.mxu0 0
      %1728 = vmatpush1.bf16.msra.mxu0 %v1721
      %1729 = vmatprep.subr.bf16.mxu0 0
      %1730 = vmatpush1.bf16.msra.mxu0 0
      %1731 = vmatprep.subr.bf16.mxu0 0
      %1732 = vmatpush1.bf16.msra.mxu0 0
      %1733 = vmatprep.subr.bf16.mxu0 0
      %1734 = vmatpush1.bf16.msra.mxu0 0
      %1735 = vmatprep.subr.bf16.mxu0 0
      %1736 = vmatpush1.bf16.msra.mxu0 0
      %1737 = vmatprep.subr.bf16.mxu0 0
      %1738 = vmatpush1.bf16.msra.mxu0 0
      %1739 = vmatprep.subr.bf16.mxu0 0
      %1740 = vmatpush1.bf16.msra.mxu0 0
      %1741 = vmatprep.subr.bf16.mxu0 0
      %1742 = vmatpush1.bf16.msra.mxu0 0
      %1743 = vmatprep.subr.bf16.mxu0 0
      %1744 = vmatpush1.bf16.msra.mxu0 0
      %1745 = vmatprep.subr.bf16.mxu0 0
      %1746 = vmatpush1.bf16.msra.mxu0 0
      %1747 = vmatprep.subr.bf16.mxu0 0
      %1748 = vmatpush1.bf16.msra.mxu0 0
      %1749 = vmatprep.subr.bf16.mxu0 0
      %1750 = vmatpush1.bf16.msra.mxu0 0
      %1751 = vmatprep.subr.bf16.mxu0 0
      %1752 = vmatpush1.bf16.msra.mxu0 0
      %1753 = vmatprep.subr.bf16.mxu0 0
      %1754 = vmatpush1.bf16.msra.mxu0 0
      %1755 = vmatprep.mubr.bf16.mxu0 0
      %1756 = vmatmul.mubr.bf16.gmra.mrb[0].mxu0 %v1694
      %v1757 = vpop.f32.mrb[0].mxu0
      %v1758 = vadd.f32 %v1675, %v1757
      %v1759 = vpop.f32.mrb[0].mxu0
      %v1760 = vpop.f32.mrb[0].mxu0
      %v1761 = vadd.f32 %v1675, %v1760
      %v1762 = vpop.f32.mrb[0].mxu0
      %1763 = vmatprep.mubr.bf16.mxu0 0
      %1764 = vmatmul.mubr.bf16.gmra.mrb[0].mxu0 %v1697
      %v1765 = vpop.f32.mrb[0].mxu0
      %v1766 = vadd.f32 %v1675, %v1765
      %v1767 = vpop.f32.mrb[0].mxu0
      %v1768 = vpop.f32.mrb[0].mxu0
      %v1769 = vadd.f32 %v1675, %v1768
      %v1770 = vpop.f32.mrb[0].mxu0
      %1771 = vmatprep.mubr.bf16.mxu0 0
      %1772 = vmatmul.mubr.bf16.gmra.mrb[0].mxu0 %v1700
      %v1773 = vpop.f32.mrb[0].mxu0
      %v1774 = vadd.f32 %v1675, %v1773
      %v1775 = vpop.f32.mrb[0].mxu0
      %v1776 = vpop.f32.mrb[0].mxu0
      %v1777 = vadd.f32 %v1675, %v1776
      %v1778 = vpop.f32.mrb[0].mxu0
      %1779 = vmatprep.mubr.bf16.mxu0 0
      %1780 = vmatmul.mubr.bf16.gmra.mrb[0].mxu0 %v1703
      %v1781 = vpop.f32.mrb[0].mxu0
      %v1782 = vadd.f32 %v1675, %v1781
      %v1783 = vpop.f32.mrb[0].mxu0
      %v1784 = vpop.f32.mrb[0].mxu0
      %v1785 = vadd.f32 %v1675, %v1784
      %v1786 = vpop.f32.mrb[0].mxu0
      %1787 = vmatprep.mubr.bf16.mxu0 0
      %1788 = vmatmul.mubr.bf16.gmra.mrb[0].mxu0 %v1706
      %v1789 = vpop.f32.mrb[0].mxu0
      %v1790 = vadd.f32 %v1675, %v1789
      %v1791 = vpop.f32.mrb[0].mxu0
      %v1792 = vpop.f32.mrb[0].mxu0
      %v1793 = vadd.f32 %v1675, %v1792
      %v1794 = vpop.f32.mrb[0].mxu0
      %1795 = vmatprep.mubr.bf16.mxu0 0
      %1796 = vmatmul.mubr.bf16.gmra.mrb[0].mxu0 %v1709
      %v1797 = vpop.f32.mrb[0].mxu0
      %v1798 = vadd.f32 %v1675, %v1797
      %v1799 = vpop.f32.mrb[0].mxu0
      %v1800 = vpop.f32.mrb[0].mxu0
      %v1801 = vadd.f32 %v1675, %v1800
      %v1802 = vpop.f32.mrb[0].mxu0
      %1803 = vmatprep.mubr.bf16.mxu0 0
      %1804 = vmatmul.mubr.bf16.gmra.mrb[0].mxu0 %v1712
      %v1805 = vpop.f32.mrb[0].mxu0
      %v1806 = vadd.f32 %v1675, %v1805
      %v1807 = vpop.f32.mrb[0].mxu0
      %v1808 = vpop.f32.mrb[0].mxu0
      %v1809 = vadd.f32 %v1675, %v1808
      %v1810 = vpop.f32.mrb[0].mxu0
      %1811 = vmatprep.mubr.bf16.mxu0 0
      %1812 = vmatmul.mubr.bf16.gmra.mrb[0].mxu0 %v1715
      %v1813 = vpop.f32.mrb[0].mxu0
      %v1814 = vadd.f32 %v1675, %v1813
      %v1815 = vpop.f32.mrb[0].mxu0
      %v1816 = vpop.f32.mrb[0].mxu0
      %v1817 = vadd.f32 %v1675, %v1816
      %v1818 = vpop.f32.mrb[0].mxu0
      %1819 = vmatprep.mubr.bf16.mxu0 0
      %1820 = vmatmul.mubr.bf16.gmra.mrb[0].mxu0 %v1718
      %v1821 = vpop.f32.mrb[0].mxu0
      %v1822 = vadd.f32 %v1675, %v1821
      %v1823 = vpop.f32.mrb[0].mxu0
      %v1824 = vpop.f32.mrb[0].mxu0
      %v1825 = vadd.f32 %v1675, %v1824
      %v1826 = vpop.f32.mrb[0].mxu0
      %1827 = vdwg.mxu0
      %v1828 = vmax.f32 %v1758, 0.0
      %v1829 = vmax.f32 %v1761, 0.0
      %v1830 = vmax.f32 %v1766, 0.0
      %v1831 = vmax.f32 %v1769, 0.0
      %v1832 = vmax.f32 %v1774, 0.0
      %v1833 = vmax.f32 %v1777, 0.0
      %v1834 = vmax.f32 %v1782, 0.0
      %v1835 = vmax.f32 %v1785, 0.0
      %v1836 = vmax.f32 %v1790, 0.0
      %v1837 = vmax.f32 %v1793, 0.0
      %v1838 = vmax.f32 %v1798, 0.0
      %v1839 = vmax.f32 %v1801, 0.0
      %v1840 = vmax.f32 %v1806, 0.0
      %v1841 = vmax.f32 %v1809, 0.0
      %v1842 = vmax.f32 %v1814, 0.0
      %v1843 = vmax.f32 %v1817, 0.0
      %v1844 = vmax.f32 %v1822, 0.0
      %v1845 = vmax.f32 %v1825, 0.0
      %v1846 = vpack.c.bf16 %v1829, %v1828
      %v1847 = vpack.c.bf16 %v1831, %v1830
      %v1848 = vpack.c.bf16 %v1833, %v1832
      %v1849 = vpack.c.bf16 %v1835, %v1834
      %v1850 = vpack.c.bf16 %v1837, %v1836
      %v1851 = vpack.c.bf16 %v1839, %v1838
      %v1852 = vpack.c.bf16 %v1841, %v1840
      %v1853 = vpack.c.bf16 %v1843, %v1842
      %v1854 = vpack.c.bf16 %v1845, %v1844
      %v1855 = vld [vmem:[%s6] sm:$0x3]
      %v1856 = vld [vmem:[%s7] sm:$0x1]
      %v1858 = vlaneseq
      %v1859 = vshrl.u32 %v1858, 7
      %v1860 = vsub.s32 0, %v1859
      %v1861 = vrot.slane %v1856, %v1860
      %v1864 = vsel %vm475, %v1846, 0
      %v1867 = vsel %vm475, %v1847, 0
      %v1870 = vsel %vm475, %v1848, 0
      %v1873 = vsel %vm475, %v1849, 0
      %v1876 = vsel %vm475, %v1850, 0
      %v1879 = vsel %vm475, %v1851, 0
      %v1882 = vsel %vm475, %v1852, 0
      %v1885 = vsel %vm475, %v1853, 0
      %v1888 = vsel %vm475, %v1854, 0
      %v1891 = vsel %vm512, %v1855, 0
      %1893 = vmatprep.subr.bf16.mxu0 0
      %1894 = vmatpush1.bf16.msra.mxu0 %v1891
      %1895 = vmatprep.subr.bf16.mxu0 0
      %1896 = vmatpush1.bf16.msra.mxu0 0
      %1897 = vmatprep.subr.bf16.mxu0 0
      %1898 = vmatpush1.bf16.msra.mxu0 0
      %1899 = vmatprep.subr.bf16.mxu0 0
      %1900 = vmatpush1.bf16.msra.mxu0 0
      %1901 = vmatprep.subr.bf16.mxu0 0
      %1902 = vmatpush1.bf16.msra.mxu0 0
      %1903 = vmatprep.subr.bf16.mxu0 0
      %1904 = vmatpush1.bf16.msra.mxu0 0
      %1905 = vmatprep.subr.bf16.mxu0 0
      %1906 = vmatpush1.bf16.msra.mxu0 0
      %1907 = vmatprep.subr.bf16.mxu0 0
      %1908 = vmatpush1.bf16.msra.mxu0 0
      %1909 = vmatprep.subr.bf16.mxu0 0
      %1910 = vmatpush1.bf16.msra.mxu0 0
      %1911 = vmatprep.subr.bf16.mxu0 0
      %1912 = vmatpush1.bf16.msra.mxu0 0
      %1913 = vmatprep.subr.bf16.mxu0 0
      %1914 = vmatpush1.bf16.msra.mxu0 0
      %1915 = vmatprep.subr.bf16.mxu0 0
      %1916 = vmatpush1.bf16.msra.mxu0 0
      %1917 = vmatprep.subr.bf16.mxu0 0
      %1918 = vmatpush1.bf16.msra.mxu0 0
      %1919 = vmatprep.subr.bf16.mxu0 0
      %1920 = vmatpush1.bf16.msra.mxu0 0
      %1921 = vmatprep.subr.bf16.mxu0 0
      %1922 = vmatpush1.bf16.msra.mxu0 0
      %1923 = vmatprep.subr.bf16.mxu0 0
      %1924 = vmatpush1.bf16.msra.mxu0 0
      %1925 = vmatprep.mubr.bf16.mxu0 0
      %1926 = vmatmul.mubr.bf16.gmra.mrb[0].mxu0 %v1864
      %v1927 = vpop.f32.mrb[0].mxu0
      %v1928 = vadd.f32 %v1861, %v1927
      %v1929 = vpop.f32.mrb[0].mxu0
      %v1930 = vpop.f32.mrb[0].mxu0
      %v1931 = vadd.f32 %v1861, %v1930
      %v1932 = vpop.f32.mrb[0].mxu0
      %1933 = vmatprep.mubr.bf16.mxu0 0
      %1934 = vmatmul.mubr.bf16.gmra.mrb[0].mxu0 %v1867
      %v1935 = vpop.f32.mrb[0].mxu0
      %v1936 = vadd.f32 %v1861, %v1935
      %v1937 = vpop.f32.mrb[0].mxu0
      %v1938 = vpop.f32.mrb[0].mxu0
      %v1939 = vadd.f32 %v1861, %v1938
      %v1940 = vpop.f32.mrb[0].mxu0
      %1941 = vmatprep.mubr.bf16.mxu0 0
      %1942 = vmatmul.mubr.bf16.gmra.mrb[0].mxu0 %v1870
      %v1943 = vpop.f32.mrb[0].mxu0
      %v1944 = vadd.f32 %v1861, %v1943
      %v1945 = vpop.f32.mrb[0].mxu0
      %v1946 = vpop.f32.mrb[0].mxu0
      %v1947 = vadd.f32 %v1861, %v1946
      %v1948 = vpop.f32.mrb[0].mxu0
      %1949 = vmatprep.mubr.bf16.mxu0 0
      %1950 = vmatmul.mubr.bf16.gmra.mrb[0].mxu0 %v1873
      %v1951 = vpop.f32.mrb[0].mxu0
      %v1952 = vadd.f32 %v1861, %v1951
      %v1953 = vpop.f32.mrb[0].mxu0
      %v1954 = vpop.f32.mrb[0].mxu0
      %v1955 = vadd.f32 %v1861, %v1954
      %v1956 = vpop.f32.mrb[0].mxu0
      %1957 = vmatprep.mubr.bf16.mxu0 0
      %1958 = vmatmul.mubr.bf16.gmra.mrb[0].mxu0 %v1876
      %v1959 = vpop.f32.mrb[0].mxu0
      %v1960 = vadd.f32 %v1861, %v1959
      %v1961 = vpop.f32.mrb[0].mxu0
      %v1962 = vpop.f32.mrb[0].mxu0
      %v1963 = vadd.f32 %v1861, %v1962
      %v1964 = vpop.f32.mrb[0].mxu0
      %1965 = vmatprep.mubr.bf16.mxu0 0
      %1966 = vmatmul.mubr.bf16.gmra.mrb[0].mxu0 %v1879
      %v1967 = vpop.f32.mrb[0].mxu0
      %v1968 = vadd.f32 %v1861, %v1967
      %v1969 = vpop.f32.mrb[0].mxu0
      %v1970 = vpop.f32.mrb[0].mxu0
      %v1971 = vadd.f32 %v1861, %v1970
      %v1972 = vpop.f32.mrb[0].mxu0
      %1973 = vmatprep.mubr.bf16.mxu0 0
      %1974 = vmatmul.mubr.bf16.gmra.mrb[0].mxu0 %v1882
      %v1975 = vpop.f32.mrb[0].mxu0
      %v1976 = vadd.f32 %v1861, %v1975
      %v1977 = vpop.f32.mrb[0].mxu0
      %v1978 = vpop.f32.mrb[0].mxu0
      %v1979 = vadd.f32 %v1861, %v1978
      %v1980 = vpop.f32.mrb[0].mxu0
      %1981 = vmatprep.mubr.bf16.mxu0 0
      %1982 = vmatmul.mubr.bf16.gmra.mrb[0].mxu0 %v1885
      %v1983 = vpop.f32.mrb[0].mxu0
      %v1984 = vadd.f32 %v1861, %v1983
      %v1985 = vpop.f32.mrb[0].mxu0
      %v1986 = vpop.f32.mrb[0].mxu0
      %v1987 = vadd.f32 %v1861, %v1986
      %v1988 = vpop.f32.mrb[0].mxu0
      %1989 = vmatprep.mubr.bf16.mxu0 0
      %1990 = vmatmul.mubr.bf16.gmra.mrb[0].mxu0 %v1888
      %v1991 = vpop.f32.mrb[0].mxu0
      %v1992 = vadd.f32 %v1861, %v1991
      %v1993 = vpop.f32.mrb[0].mxu0
      %v1994 = vpop.f32.mrb[0].mxu0
      %v1995 = vadd.f32 %v1861, %v1994
      %v1996 = vpop.f32.mrb[0].mxu0
      %1997 = vdwg.mxu0
      %v1998 = vunpack.c.l.bf16 %v365
      %v1999 = vunpack.c.l.bf16 %v366
      %v2000 = vunpack.c.l.bf16 %v367
      %v2001 = vunpack.c.l.bf16 %v368
      %v2002 = vunpack.c.l.bf16 %v369
      %v2003 = vunpack.c.l.bf16 %v370
      %v2004 = vunpack.c.l.bf16 %v371
      %v2005 = vunpack.c.l.bf16 %v372
      %v2006 = vunpack.c.l.bf16 %v373
      %v2007 = vunpack.c.l.bf16 %v374
      %v2008 = vunpack.c.l.bf16 %v375
      %v2009 = vunpack.c.l.bf16 %v376
      %v2010 = vunpack.c.l.bf16 %v377
      %v2011 = vunpack.c.l.bf16 %v378
      %v2012 = vunpack.c.l.bf16 %v379
      %v2013 = vunpack.c.l.bf16 %v380
      %v2014 = vunpack.c.l.bf16 %v381
      %v2015 = vunpack.c.l.bf16 %v382
      %v2016 = vunpack.c.l.bf16 %v383
      %v2035 = vrot.slane %v1928, 6
      %v2036 = vrot.slane %v1931, 6
      %v2037 = vsel %vm512, %v2035, %v2036
      %v2038 = vrot.slane %v1936, 6
      %v2039 = vsel %vm512, %v2036, %v2038
      %v2040 = vrot.slane %v1939, 6
      %v2041 = vsel %vm512, %v2038, %v2040
      %v2042 = vrot.slane %v1944, 6
      %v2043 = vsel %vm512, %v2040, %v2042
      %v2044 = vrot.slane %v1947, 6
      %v2045 = vsel %vm512, %v2042, %v2044
      %v2046 = vrot.slane %v1952, 6
      %v2047 = vsel %vm512, %v2044, %v2046
      %v2048 = vrot.slane %v1955, 6
      %v2049 = vsel %vm512, %v2046, %v2048
      %v2050 = vrot.slane %v1960, 6
      %v2051 = vsel %vm512, %v2048, %v2050
      %v2052 = vrot.slane %v1963, 6
      %v2053 = vsel %vm512, %v2050, %v2052
      %v2054 = vrot.slane %v1968, 6
      %v2055 = vsel %vm512, %v2052, %v2054
      %v2056 = vrot.slane %v1971, 6
      %v2057 = vsel %vm512, %v2054, %v2056
      %v2058 = vrot.slane %v1976, 6
      %v2059 = vsel %vm512, %v2056, %v2058
      %v2060 = vrot.slane %v1979, 6
      %v2061 = vsel %vm512, %v2058, %v2060
      %v2062 = vrot.slane %v1984, 6
      %v2063 = vsel %vm512, %v2060, %v2062
      %v2064 = vrot.slane %v1987, 6
      %v2065 = vsel %vm512, %v2062, %v2064
      %v2066 = vrot.slane %v1992, 6
      %v2067 = vsel %vm512, %v2064, %v2066
      %v2068 = vrot.slane %v1995, 6
      %v2069 = vsel %vm512, %v2066, %v2068
      %v2089 = vadd.f32 %v1998, %v2035
      %v2090 = vadd.f32 %v1999, %v2037
      %v2091 = vadd.f32 %v2000, %v2039
      %v2092 = vadd.f32 %v2001, %v2041
      %v2093 = vadd.f32 %v2002, %v2043
      %v2094 = vadd.f32 %v2003, %v2045
      %v2095 = vadd.f32 %v2004, %v2047
      %v2096 = vadd.f32 %v2005, %v2049
      %v2097 = vadd.f32 %v2006, %v2051
      %v2098 = vadd.f32 %v2007, %v2053
      %v2099 = vadd.f32 %v2008, %v2055
      %v2100 = vadd.f32 %v2009, %v2057
      %v2101 = vadd.f32 %v2010, %v2059
      %v2102 = vadd.f32 %v2011, %v2061
      %v2103 = vadd.f32 %v2012, %v2063
      %v2104 = vadd.f32 %v2013, %v2065
      %v2105 = vadd.f32 %v2014, %v2067
      %v2106 = vadd.f32 %v2015, %v2069
      %v2107 = vadd.f32 %v2016, %v2068
      %v2108 = vmax.f32 %v2089, 0.0
      %v2109 = vmax.f32 %v2090, 0.0
      %v2110 = vmax.f32 %v2091, 0.0
      %v2111 = vmax.f32 %v2092, 0.0
      %v2112 = vmax.f32 %v2093, 0.0
      %v2113 = vmax.f32 %v2094, 0.0
      %v2114 = vmax.f32 %v2095, 0.0
      %v2115 = vmax.f32 %v2096, 0.0
      %v2116 = vmax.f32 %v2097, 0.0
      %v2117 = vmax.f32 %v2098, 0.0
      %v2118 = vmax.f32 %v2099, 0.0
      %v2119 = vmax.f32 %v2100, 0.0
      %v2120 = vmax.f32 %v2101, 0.0
      %v2121 = vmax.f32 %v2102, 0.0
      %v2122 = vmax.f32 %v2103, 0.0
      %v2123 = vmax.f32 %v2104, 0.0
      %v2124 = vmax.f32 %v2105, 0.0
      %v2125 = vmax.f32 %v2106, 0.0
      %v2126 = vmax.f32 %v2107, 0.0
      %vm2127 = vcmask 31746
      %2128 = vst.msk [vmem:[%s361 - $0x2] sm:$0xfc] %vm2127, %v2108
      %2129 = vst.msk [vmem:[%s361 + $0x6] sm:$0xff] %vm475, %v2109
      %2130 = vst.msk [vmem:[%s361 + $0xe] sm:$0xff] %vm475, %v2110
      %2131 = vst.msk [vmem:[%s361 + $0x16] sm:$0xff] %vm475, %v2111
      %2132 = vst.msk [vmem:[%s361 + $0x1e] sm:$0xff] %vm475, %v2112
      %2133 = vst.msk [vmem:[%s361 + $0x26] sm:$0xff] %vm475, %v2113
      %2134 = vst.msk [vmem:[%s361 + $0x2e] sm:$0xff] %vm475, %v2114
      %2135 = vst.msk [vmem:[%s361 + $0x36] sm:$0xff] %vm475, %v2115
      %2136 = vst.msk [vmem:[%s361 + $0x3e] sm:$0xff] %vm475, %v2116
      %2137 = vst.msk [vmem:[%s361 + $0x46] sm:$0xff] %vm475, %v2117
      %2138 = vst.msk [vmem:[%s361 + $0x4e] sm:$0xff] %vm475, %v2118
      %2139 = vst.msk [vmem:[%s361 + $0x56] sm:$0xff] %vm475, %v2119
      %2140 = vst.msk [vmem:[%s361 + $0x5e] sm:$0xff] %vm475, %v2120
      %2141 = vst.msk [vmem:[%s361 + $0x66] sm:$0xff] %vm475, %v2121
      %2142 = vst.msk [vmem:[%s361 + $0x6e] sm:$0xff] %vm475, %v2122
      %2143 = vst.msk [vmem:[%s361 + $0x76] sm:$0xff] %vm475, %v2123
      %2144 = vst.msk [vmem:[%s361 + $0x7e] sm:$0xff] %vm475, %v2124
      %2145 = vst.msk [vmem:[%s361 + $0x86] sm:$0xff] %vm475, %v2125
      %vm2146 = vcmask 25600
      %2147 = vst.msk [vmem:[%s361 + $0x8e] sm:$0x3] %vm2146, %v2126
      %p2148 = scmp.lt.s32.totalorder %s23, 1
      %s2149 = scalar_select %p2148, %s23, 1
      %p2150 = scmp.lt.s32.totalorder %s24, 1
      %s2151 = scalar_select %p2150, %s24, 1
      %s2152 = smul.addr %s2151, 18
      %s2153 = smul.addr %s2149, 36
      %s2154 = sadd.s32 %s2152, %s2153
      %s2155 = smul.addr %s2154, 8
      %s2156 = scalar_lea.vmem %s8, %s2155
      // Predicated region
      $region53: #{tpu_custom_call.1} parent=51 // pred_check
        %p2157 = pneg %p231
      $region54: #{tpu_custom_call.1} parent=51 // pred_check_branch
        %2159 = sbr.rel (%p2157) target = $region56
      $region55: #{tpu_custom_call.1} parent=51 // pred_region
        _
      $region56: #{tpu_custom_call.1} parent=51 // pred_fallthru
        _
    $region52: #{tpu_custom_call.1} parent=5 // pred_fallthru
      _
    %p2160 = scmp.le.s32.totalorder 2, %s14
    // Predicated region
    $region57: #{tpu_custom_call.1} parent=5 // pred_check
      %p2161 = pneg %p2160
    $region58: #{tpu_custom_call.1} parent=5 // pred_check_branch
      %2163 = sbr.rel (%p2161) target = $region60
    $region59: #{tpu_custom_call.1} parent=5 // pred_region
      %s2164 = ssub.s32 %s14, 2
      // Predicated region
      $region61: #{tpu_custom_call.1} parent=59 // pred_check
        %p2165 = pneg %p237
      $region62: #{tpu_custom_call.1} parent=59 // pred_check_branch
        %2167 = sbr.rel (%p2165) target = $region64
      $region63: #{tpu_custom_call.1} parent=59 // pred_region
        %p2168 = scmp.lt.s32.totalorder %s25, 1
        %s2169 = scalar_select %p2168, %s25, 1
        %p2170 = scmp.lt.s32.totalorder %s26, 1
        %s2171 = scalar_select %p2170, %s26, 1
        %s2172 = smul.addr %s2171, 18
        %s2173 = smul.addr %s2169, 36
        %s2174 = sadd.s32 %s2172, %s2173
        %s2175 = smul.addr %s2174, 8
        %s2176 = scalar_lea.vmem %s8, %s2175
      $region64: #{tpu_custom_call.1} parent=59 // pred_fallthru
        _
    $region60: #{tpu_custom_call.1} parent=5 // pred_fallthru
      _
  $region6: #{tpu_custom_call.1} parent=0 // loop_footer
    %s18 = sadd.s32 1, %s14
  $region7: #{tpu_custom_call.1} parent=0 // loop_footer_branch
    %13 = sbr.rel target = $region3
  $region8: #{tpu_custom_call.1} parent=0 // loop_exit
    _

</llo_original>
